<compile_context>
chip_gen: v7x
topology: tpu7x:2x2x1
jax: 0.10.0
libtpu: 0.0.40
codegen_flags: <defaults>
</compile_context>

<pallas_src>
import functools

import jax
import jax.numpy as jnp
from jax import lax
from jax.experimental import pallas as pl
from jax.experimental.pallas import tpu as pltpu

_PAD_SENTINEL = 1e30  # large finite value: padded rows/cols never win a min


def _chamfer_kernel(xa_ref, ya_ref, d1_ref, d2p_ref, d1_acc, *, t2):
    j = pl.program_id(2)

    xa = xa_ref[0]   # (t1, 5)  [-2x | x2 + row_bias | 1]
    ya = ya_ref[0]   # (5, t2)  [y^T ; 1 ; y2 + col_bias]

    # One MXU op emits the (bias-masked) squared-distance tile directly:
    #   d = -2*x.y + ||x||^2 + ||y||^2 (+ sentinel on padded rows/cols).
    d = jnp.dot(xa, ya, preferred_element_type=jnp.float32,
                precision=lax.Precision.HIGHEST)          # (t1, t2)

    # dist2: per-(i, j) partial column min (sublane reduce).  The reduction
    # over i-tiles happens outside the kernel, which keeps the i grid axis
    # "parallel" (both v7x TensorCores busy even for B == 1) and writes each
    # lane-dense output block exactly once (no per-step HBM re-writeback).
    d2p_ref[0, 0, 0] = jnp.min(d, axis=0)

    # dist1: keep the cross-lane reduce out of the inner loop — fold the tile
    # into a (t1, 128) running min with pure-VPU, lane-aligned vreg mins ...
    n_blk = t2 // 128
    m = d[:, 0:128]
    for k in range(1, n_blk):
        m = jnp.minimum(m, d[:, k * 128:(k + 1) * 128])

    @pl.when(j == 0)
    def _():
        d1_acc[...] = m

    @pl.when(j > 0)
    def _():
        d1_acc[...] = jnp.minimum(d1_acc[...], m)

    # ... and do the single XLU cross-lane reduce + sublane->lane relayout
    # once per i-tile, into the lane-dense dist1 output block.
    @pl.when(j == pl.num_programs(2) - 1)
    def _():
        d1_ref[0, 0] = jnp.min(d1_acc[...], axis=1)


def _round_up(n, m):
    return ((n + m - 1) // m) * m


def _tile_and_pad(n, max_tile):
    # Round everything up to multiples of 128 so the distance tile is built
    # from full (8,128) vregs and output stores are unmasked (lane-dense) vst.
    max_tile = max(128, _round_up(max_tile, 128))
    padded = _round_up(n, 128)
    if padded <= max_tile:
        return padded, padded
    padded = _round_up(n, max_tile)
    return max_tile, padded


def _pick_config():
    """Generation-aware tiles / VMEM budget (v5e/v6e: 128 MiB, v7x: 64 MiB)."""
    t1, t2, vmem = 1024, 1024, 40 * 1024 * 1024           # v7x-safe default
    try:
        if hasattr(pltpu, "get_tpu_info"):
            info = pltpu.get_tpu_info()
            cap = getattr(info, "vmem_capacity_bytes", 0) or 0
            if cap >= 100 * 1024 * 1024:                   # v5e / v6e
                t1, t2, vmem = 1024, 2048, 80 * 1024 * 1024
    except Exception:
        pass
    return t1, t2, vmem


def chamfer_forward(xyz1, xyz2, *, tile1=None, tile2=None, vmem_limit_bytes=None):
    """Returns (dist1 [B,N1], dist2 [B,N2]) of squared nearest-neighbor dists."""
    B, N1, _ = xyz1.shape
    _, N2, _ = xyz2.shape

    cfg_t1, cfg_t2, cfg_vmem = _pick_config()
    t1, n1p = _tile_and_pad(N1, tile1 if tile1 is not None else cfg_t1)
    t2, n2p = _tile_and_pad(N2, tile2 if tile2 is not None else cfg_t2)
    vmem = vmem_limit_bytes if vmem_limit_bytes is not None else cfg_vmem
    n_i, n_j = n1p // t1, n2p // t2

    x = xyz1.astype(jnp.float32)
    y = xyz2.astype(jnp.float32)
    if n1p != N1:
        x = jnp.pad(x, ((0, 0), (0, n1p - N1), (0, 0)))
    if n2p != N2:
        y = jnp.pad(y, ((0, 0), (0, n2p - N2), (0, 0)))

    # Augmented MXU operands (O(B*N) wrapper work vs O(B*N1*N2) kernel work):
    #   LHS (B, n1p, 5) = [-2*x | ||x||^2 + row_pad_bias | 1]
    #   RHS (B, 5, n2p) = [y^T  ; 1      ; ||y||^2 + col_pad_bias]
    # so dot(LHS, RHS) = ||x||^2 + ||y||^2 - 2 x.y with padding pre-masked.
    x2 = jnp.sum(x * x, axis=-1)
    x2 = jnp.where(jnp.arange(n1p)[None, :] < N1, x2, _PAD_SENTINEL)
    ones1 = jnp.ones((B, n1p, 1), jnp.float32)
    x_aug = jnp.concatenate([-2.0 * x, x2[..., None], ones1], axis=-1)

    y2 = jnp.sum(y * y, axis=-1)
    y2 = jnp.where(jnp.arange(n2p)[None, :] < N2, y2, _PAD_SENTINEL)
    yt = jnp.transpose(y, (0, 2, 1))                       # (B, 3, n2p)
    ones2 = jnp.ones((B, 1, n2p), jnp.float32)
    y_aug = jnp.concatenate([yt, ones2, y2[:, None, :]], axis=1)

    kernel = functools.partial(_chamfer_kernel, t2=t2)

    dist1, dist2_part = pl.pallas_call(
        kernel,
        out_shape=(
            jax.ShapeDtypeStruct((B, 1, n1p), jnp.float32),
            jax.ShapeDtypeStruct((B, n_i, 1, n2p), jnp.float32),
        ),
        grid_spec=pltpu.PrefetchScalarGridSpec(
            num_scalar_prefetch=0,
            grid=(B, n_i, n_j),
            in_specs=[
                # x tile is invariant in j: not re-DMA'd across the inner axis.
                pl.BlockSpec((1, t1, 5), lambda b, i, j: (b, i, 0)),
                pl.BlockSpec((1, 5, t2), lambda b, i, j: (b, 0, j)),
            ],
            out_specs=[
                pl.BlockSpec((1, 1, t1), lambda b, i, j: (b, 0, i)),
                pl.BlockSpec((1, 1, 1, t2), lambda b, i, j: (b, i, 0, j)),
            ],
            scratch_shapes=[
                pltpu.VMEM((t1, 128), jnp.float32),   # dist1 running min
            ],
        ),
        compiler_params=pltpu.CompilerParams(
            # j carries the dist1 accumulator -> arbitrary; b and i carry no
            # cross-iteration state, so both shard across TensorCores.
            dimension_semantics=("parallel", "parallel", "arbitrary"),
            vmem_limit_bytes=vmem,
        ),
    )(x_aug, y_aug)

    dist1 = dist1[:, 0, :N1]
    dist2 = jnp.min(dist2_part[:, :, 0, :], axis=1)[:, :N2]
    return dist1, dist2


class ChamferDistanceL2:
    """JAX/Pallas port of the PyTorch ChamferDistanceL2 module (forward only)."""

    def __init__(self, ignore_zeros=False):
        self.ignore_zeros = ignore_zeros

    def __call__(self, xyz1, xyz2, weights1=None, weights2=None):
        batch_size = xyz1.shape[0]
        if batch_size == 1 and self.ignore_zeros:
            # TODO(synk): data-dependent boolean-mask compaction (dynamic
            # shapes) has no clean static-shape Pallas equivalent; skipped.
            pass

        dist1, dist2 = chamfer_forward(xyz1, xyz2)

        if weights1 is not None:
            if weights1.ndim == 2:
                dist1 = dist1 * weights1
            elif weights1.ndim == 3 and weights1.shape[2] == 1:
                dist1 = dist1 * weights1[..., 0]
        if weights2 is not None:
            if weights2.ndim == 2:
                dist2 = dist2 * weights2
            elif weights2.ndim == 3 and weights2.shape[2] == 1:
                dist2 = dist2 * weights2[..., 0]

        if weights1 is not None:
            dist1_avg = jnp.sum(dist1) / jnp.sum(weights1)
        else:
            dist1_avg = jnp.mean(dist1)
        if weights2 is not None:
            dist2_avg = jnp.sum(dist2) / jnp.sum(weights2)
        else:
            dist2_avg = jnp.mean(dist2)

        return (dist1_avg + dist2_avg) / 2.0


def _chamfer_reference(xyz1, xyz2):
    # Pure-JAX reference for correctness checks.
    diff = xyz1[:, :, None, :] - xyz2[:, None, :, :]    # (B, N1, N2, 3)
    d = jnp.sum(diff * diff, axis=-1)                   # (B, N1, N2)
    return jnp.min(d, axis=2), jnp.min(d, axis=1)


if __name__ == "__main__":
    key = jax.random.PRNGKey(0)
    k1, k2, k3, k4 = jax.random.split(key, 4)

    # Test 1: small single-tile path (module-style usage, padded 16 -> 128).
    B, N1, N2 = 2, 16, 16
    xyz1 = jax.random.normal(k1, (B, N1, 3), dtype=jnp.float32)
    xyz2 = jax.random.normal(k2, (B, N2, 3), dtype=jnp.float32)

    module = ChamferDistanceL2()
    out = jax.block_until_ready(module(xyz1, xyz2))

    d1_ref, d2_ref = _chamfer_reference(xyz1, xyz2)
    ref_out = (jnp.mean(d1_ref) + jnp.mean(d2_ref)) / 2.0
    assert jnp.allclose(out, ref_out, rtol=1e-4, atol=1e-5), (out, ref_out)

    # Test 2: multi-tile / ragged / padded path (forced 128x128 tiles), which
    # exercises the dist1 running-min accumulator, the j-epilogue, and the
    # per-i-tile dist2 partial outputs with the outside reduction.
    N1b, N2b = 300, 260
    xa = jax.random.normal(k3, (B, N1b, 3), dtype=jnp.float32)
    xb = jax.random.normal(k4, (B, N2b, 3), dtype=jnp.float32)
    d1, d2 = chamfer_forward(xa, xb, tile1=128, tile2=128)
    d1, d2 = jax.block_until_ready((d1, d2))
    d1r, d2r = _chamfer_reference(xa, xb)
    assert jnp.allclose(d1, d1r, rtol=1e-4, atol=1e-4), "dist1 mismatch"
    assert jnp.allclose(d2, d2r, rtol=1e-4, atol=1e-4), "dist2 mismatch"

    print("KERNEL_OK")
</pallas_src>

<mosaic_0001>
module attributes {stable_mosaic.version = 11 : i64} {
  func.func @_chamfer_kernel(%arg0: i32, %arg1: i32, %arg2: i32, %arg3: memref<1x128x5xf32, #tpu.memory_space<vmem>>, %arg4: memref<1x5x128xf32, #tpu.memory_space<vmem>>, %arg5: memref<1x1x128xf32, #tpu.memory_space<vmem>>, %arg6: memref<1x1x1x128xf32, #tpu.memory_space<vmem>>, %arg7: memref<128x128xf32, #tpu.memory_space<vmem>>) attributes {dimension_semantics = [#tpu.dimension_semantics<parallel>, #tpu.dimension_semantics<parallel>, #tpu.dimension_semantics<arbitrary>], iteration_bounds = array<i64: 2, 1, 1>, scalar_prefetch = 0 : i64, scratch_operands = 1 : i64, tpu.core_type = #tpu.core_type<tc>, window_params = [{transform_indices = @transform_0, window_bounds = array<i64: 1, 128, 5>}, {transform_indices = @transform_1, window_bounds = array<i64: 1, 5, 128>}, {transform_indices = @transform_2, window_bounds = array<i64: 1, 1, 128>}, {transform_indices = @transform_3, window_bounds = array<i64: 1, 1, 1, 128>}]} {
    %c0 = arith.constant 0 : index
    %c0_0 = arith.constant 0 : index
    %c0_1 = arith.constant 0 : index
    %0 = vector.load %arg3[%c0, %c0_0, %c0_1] : memref<1x128x5xf32, #tpu.memory_space<vmem>>, vector<1x128x5xf32>
    %1 = vector.shape_cast %0 : vector<1x128x5xf32> to vector<128x5xf32>
    %c0_2 = arith.constant 0 : index
    %c0_3 = arith.constant 0 : index
    %c0_4 = arith.constant 0 : index
    %2 = vector.load %arg4[%c0_2, %c0_3, %c0_4] : memref<1x5x128xf32, #tpu.memory_space<vmem>>, vector<1x5x128xf32>
    %3 = vector.shape_cast %2 : vector<1x5x128xf32> to vector<5x128xf32>
    %cst = arith.constant dense<0.000000e+00> : vector<128x128xf32>
    %4 = tpu.matmul %1, %3, %cst {dimension_numbers = #tpu.dot_dimension_numbers<[1], [0], [0], [1], [0, 0, 1, 1], [], []>, precision = #tpu.contract_precision<fp32>} : vector<128x5xf32>, vector<5x128xf32>, vector<128x128xf32> -> vector<128x128xf32>
    %cst_5 = arith.constant dense<0x7F800000> : vector<128xf32>
    %5 = vector.multi_reduction <minimumf>, %4, %cst_5 [0] : vector<128x128xf32> to vector<128xf32>
    %c0_6 = arith.constant 0 : index
    %c0_7 = arith.constant 0 : index
    %c0_8 = arith.constant 0 : index
    %c0_9 = arith.constant 0 : index
    %6 = vector.load %arg6[%c0_6, %c0_7, %c0_8, %c0_9] : memref<1x1x1x128xf32, #tpu.memory_space<vmem>>, vector<1x1x1x128xf32>
    %7 = vector.shape_cast %6 : vector<1x1x1x128xf32> to vector<128xf32>
    %8 = vector.shape_cast %5 : vector<128xf32> to vector<1x1x1x128xf32>
    tpu.vector_store %arg6[%c0_6, %c0_7, %c0_8, %c0_9], %8 {strides = array<i32>} : memref<1x1x1x128xf32, #tpu.memory_space<vmem>>, vector<1x1x1x128xf32>,
    %c0_i32 = arith.constant 0 : i32
    %9 = arith.cmpi eq, %arg2, %c0_i32 : i32
    %10 = arith.extui %9 : i1 to i32
    %c0_i32_10 = arith.constant 0 : i32
    %11 = arith.cmpi ne, %10, %c0_i32_10 : i32
    scf.if %11 {
      %c0_15 = arith.constant 0 : index
      %c0_16 = arith.constant 0 : index
      %18 = vector.load %arg7[%c0_15, %c0_16] : memref<128x128xf32, #tpu.memory_space<vmem>>, vector<128x128xf32>
      tpu.vector_store %arg7[%c0_15, %c0_16], %4 {strides = array<i32>} : memref<128x128xf32, #tpu.memory_space<vmem>>, vector<128x128xf32>,
    } else {
    }
    %c0_i32_11 = arith.constant 0 : i32
    %12 = arith.cmpi sgt, %arg2, %c0_i32_11 : i32
    %13 = arith.extui %12 : i1 to i32
    %c0_i32_12 = arith.constant 0 : i32
    %14 = arith.cmpi ne, %13, %c0_i32_12 : i32
    scf.if %14 {
      %c0_15 = arith.constant 0 : index
      %c0_16 = arith.constant 0 : index
      %18 = vector.load %arg7[%c0_15, %c0_16] : memref<128x128xf32, #tpu.memory_space<vmem>>, vector<128x128xf32>
      %19 = arith.minimumf %18, %4 : vector<128x128xf32>
      %c0_17 = arith.constant 0 : index
      %c0_18 = arith.constant 0 : index
      %20 = vector.load %arg7[%c0_17, %c0_18] : memref<128x128xf32, #tpu.memory_space<vmem>>, vector<128x128xf32>
      tpu.vector_store %arg7[%c0_17, %c0_18], %19 {strides = array<i32>} : memref<128x128xf32, #tpu.memory_space<vmem>>, vector<128x128xf32>,
    } else {
    }
    %c0_i32_13 = arith.constant 0 : i32
    %15 = arith.cmpi eq, %arg2, %c0_i32_13 : i32
    %16 = arith.extui %15 : i1 to i32
    %c0_i32_14 = arith.constant 0 : i32
    %17 = arith.cmpi ne, %16, %c0_i32_14 : i32
    scf.if %17 {
      %c0_15 = arith.constant 0 : index
      %c0_16 = arith.constant 0 : index
      %18 = vector.load %arg7[%c0_15, %c0_16] : memref<128x128xf32, #tpu.memory_space<vmem>>, vector<128x128xf32>
      %cst_17 = arith.constant dense<0x7F800000> : vector<128xf32>
      %19 = vector.multi_reduction <minimumf>, %18, %cst_17 [1] : vector<128x128xf32> to vector<128xf32>
      %c0_18 = arith.constant 0 : index
      %c0_19 = arith.constant 0 : index
      %c0_20 = arith.constant 0 : index
      %20 = vector.load %arg5[%c0_18, %c0_19, %c0_20] : memref<1x1x128xf32, #tpu.memory_space<vmem>>, vector<1x1x128xf32>
      %21 = vector.shape_cast %20 : vector<1x1x128xf32> to vector<128xf32>
      %22 = vector.shape_cast %19 : vector<128xf32> to vector<1x1x128xf32>
      tpu.vector_store %arg5[%c0_18, %c0_19, %c0_20], %22 {strides = array<i32>} : memref<1x1x128xf32, #tpu.memory_space<vmem>>, vector<1x1x128xf32>,
    } else {
    }
    return
  }
  func.func @transform_0(%arg0: i32, %arg1: i32, %arg2: i32) -> (i32, i32, i32) {
    %c0_i32 = arith.constant 0 : i32
    %c0_i32_0 = arith.constant 0 : i32
    return %arg0, %arg1, %c0_i32 : i32, i32, i32
  }
  func.func @transform_1(%arg0: i32, %arg1: i32, %arg2: i32) -> (i32, i32, i32) {
    %c0_i32 = arith.constant 0 : i32
    %c0_i32_0 = arith.constant 0 : i32
    return %arg0, %c0_i32, %arg2 : i32, i32, i32
  }
  func.func @transform_2(%arg0: i32, %arg1: i32, %arg2: i32) -> (i32, i32, i32) {
    %c0_i32 = arith.constant 0 : i32
    %c0_i32_0 = arith.constant 0 : i32
    return %arg0, %c0_i32, %arg1 : i32, i32, i32
  }
  func.func @transform_3(%arg0: i32, %arg1: i32, %arg2: i32) -> (i32, i32, i32, i32) {
    %c0_i32 = arith.constant 0 : i32
    %c0_i32_0 = arith.constant 0 : i32
    return %arg0, %arg1, %c0_i32, %arg2 : i32, i32, i32, i32
  }
}

</mosaic_0001>

<llo_original>
// kernel: tpu_custom_call.1
$region0: #{tpu_custom_call.1}
  #allocation0 [shape = 'u32[]', space=smem, size = 0x4, offset = 0x4, fixed_abs, tag = 'smem constant byte address 0x4 - core index']
  #allocation1 [shape = 'u32[144,128]{1,0:T(1,128)}', space=vmem, size = 0x12000, scoped, tag = 'internal scratch']
  #allocation2 [shape = 'f32[128,128]{1,0:T(8,128)}', space=vmem, size = 0x10000, scoped, tag = 'scratch operand']
  %s0 = inlined_call_operand.vmem [shape: f32[2,128,5], index: 0, kind: input, shape index: {}]
  %s1 = inlined_call_operand.vmem [shape: f32[2,5,128], index: 1, kind: input, shape index: {}]
  %s2 = inlined_call_operand.hbm [shape: f32[2,1,128], index: 2, kind: output, shape index: {0}]
  %s3 = inlined_call_operand.hbm [shape: f32[2,1,1,128], index: 3, kind: output, shape index: {1}]
  %4 = xla_tuple %s2, %s3
  %s5 = sld [smem:[#allocation0]]
  $region61: #{tpu_custom_call.1} parent=0
    _
  %s7 = ssub.s32 1, %s5
  %s8 = scalar_select 0, %s7, %s5
  $region1: #{tpu_custom_call.1} parent=0
    #allocation3 [shape = 'u8[1024]{0}', space=vmem, size = 0x400, scoped, tag = 'output window, operand 0']
    #allocation4 [shape = 's32[2]{0}', space=sflag, size = 0x8, scoped, tag = 'scoped memory for tpu_custom_call.1']
    #allocation5 [shape = 'u8[1024]{0}', space=vmem, size = 0x400, scoped, tag = 'output window, operand 1']
    #allocation6 [shape = 's32[2]{0}', space=sflag, size = 0x8, scoped, tag = 'scoped memory for tpu_custom_call.1']
    %9 = vsyncpa [#allocation4], 0
    %s10 = scalar_lea.sflag [#allocation4], 1
    %11 = vsyncpa %s10, 0
    %12 = vsyncpa [#allocation6], 0
    %s13 = scalar_lea.sflag [#allocation6], 1
    %14 = vsyncpa %s13, 0
    loop: start=0, step=1, limit=4
    $region2: #{tpu_custom_call.1} parent=1 // loop_pre_header
      _
    $region3: #{tpu_custom_call.1} parent=1 // loop_header
      %s16 = sphi 0, %s20
      %p17 = scmp.ge.s32.totalorder %s16, 4
      %s23 = sphi 0, %s42
      %s24 = sphi 0, %s38
      %s25 = sphi 0, %s34
      %s26 = sphi 0, %s23
      %s27 = sphi 0, %s24
      %s28 = sphi 0, %s25
      %s29 = sphi 0, %s26
      %s30 = sphi 0, %s27
      %s31 = sphi 0, %s28
      %s47 = sphi 0, %s49
      %s50 = sphi 0, %s47
      %s51 = sphi 0, %s50
      %s67 = sphi 0, %s51
      %s75 = sphi 0, %s77
      %s78 = sphi 0, %s75
      %s79 = sphi 0, %s78
      %s95 = sphi 0, %s79
      %s103 = sphi 0, %s105
      %s106 = sphi 0, %s103
      %s107 = sphi 0, %s106
      %s123 = sphi 0, %s107
      %s133 = sphi 0, %s135
      %s136 = sphi 0, %s133
      %s137 = sphi 0, %s136
      %s153 = sphi 0, %s137
    $region4: #{tpu_custom_call.1} parent=1 // loop_header_branch
      %19 = sbr.rel (%p17) target = $region8
    $region5: #{tpu_custom_call.1} parent=1 // loop_body
      %s21 = ssub.s32 %s16, 1
      %s22 = ssub.s32 %s16, 2
      %s32 = sadd.s32 1, %s25
      %p33 = scmp.ge.s32.totalorder %s32, 1
      %s34 = scalar_select %p33, 0, %s32
      %s35 = sadd.s32 1, %s24
      %s36 = scalar_select %p33, %s35, %s24
      %p37 = scmp.ge.s32.totalorder %s36, 1
      %s38 = scalar_select %p37, 0, %s36
      %s39 = sadd.s32 1, %s23
      %s40 = scalar_select %p37, %s39, %s23
      %p41 = scmp.ge.s32.totalorder %s40, 2
      %s42 = scalar_select %p41, 0, %s40
      %s43 = ssub.s32 %s23, %s42
      %s44 = ssub.s32 %s24, %s38
      %s45 = sor.u32 %s43, %s44
      %p46 = scmp.eq.s32.totalorder %s45, 0
      %s48 = sadd.s32 %s47, 1
      %s49 = scalar_select %p46, %s47, %s48
      %p52 = pneg %p46
      %p53 = scmp.eq.s32.totalorder %s16, 1
      %p54 = por %p52, %p53
      %p55 = scmp.ne.s32.totalorder %s47, %s50
      %p56 = scmp.eq.s32.totalorder %s16, 0
      %p57 = por %p55, %p56
      %p58 = scmp.ne.s32.totalorder %s47, %s50
      %p59 = scmp.eq.s32.totalorder %s21, 1
      %p60 = por %p58, %p59
      %p61 = scmp.ne.s32.totalorder %s50, %s51
      %p62 = scmp.eq.s32.totalorder %s21, 0
      %p63 = por %p61, %p62
      %p64 = scmp.ne.s32.totalorder %s50, %s51
      %p65 = scmp.eq.s32.totalorder %s22, 1
      %p66 = por %p64, %p65
      %p68 = scmp.ne.s32.totalorder %s51, %s67
      %p69 = scmp.eq.s32.totalorder %s22, 0
      %p70 = por %p68, %p69
      %s71 = ssub.s32 %s23, %s42
      %s72 = ssub.s32 %s25, %s34
      %s73 = sor.u32 %s71, %s72
      %p74 = scmp.eq.s32.totalorder %s73, 0
      %s76 = sadd.s32 %s75, 1
      %s77 = scalar_select %p74, %s75, %s76
      %p80 = pneg %p74
      %p81 = scmp.eq.s32.totalorder %s16, 1
      %p82 = por %p80, %p81
      %p83 = scmp.ne.s32.totalorder %s75, %s78
      %p84 = scmp.eq.s32.totalorder %s16, 0
      %p85 = por %p83, %p84
      %p86 = scmp.ne.s32.totalorder %s75, %s78
      %p87 = scmp.eq.s32.totalorder %s21, 1
      %p88 = por %p86, %p87
      %p89 = scmp.ne.s32.totalorder %s78, %s79
      %p90 = scmp.eq.s32.totalorder %s21, 0
      %p91 = por %p89, %p90
      %p92 = scmp.ne.s32.totalorder %s78, %s79
      %p93 = scmp.eq.s32.totalorder %s22, 1
      %p94 = por %p92, %p93
      %p96 = scmp.ne.s32.totalorder %s79, %s95
      %p97 = scmp.eq.s32.totalorder %s22, 0
      %p98 = por %p96, %p97
      %s99 = ssub.s32 %s23, %s42
      %s100 = ssub.s32 %s24, %s38
      %s101 = sor.u32 %s99, %s100
      %p102 = scmp.eq.s32.totalorder %s101, 0
      %s104 = sadd.s32 %s103, 1
      %s105 = scalar_select %p102, %s103, %s104
      %p108 = pneg %p102
      %p109 = scmp.eq.s32.totalorder %s16, 1
      %p110 = por %p108, %p109
      %p111 = scmp.ne.s32.totalorder %s103, %s106
      %p112 = scmp.eq.s32.totalorder %s16, 0
      %p113 = por %p111, %p112
      %p114 = scmp.ne.s32.totalorder %s103, %s106
      %p115 = scmp.eq.s32.totalorder %s21, 1
      %p116 = por %p114, %p115
      %p117 = scmp.ne.s32.totalorder %s106, %s107
      %p118 = scmp.eq.s32.totalorder %s21, 0
      %p119 = por %p117, %p118
      %p120 = scmp.ne.s32.totalorder %s106, %s107
      %p121 = scmp.eq.s32.totalorder %s22, 1
      %p122 = por %p120, %p121
      %p124 = scmp.ne.s32.totalorder %s107, %s123
      %p125 = scmp.eq.s32.totalorder %s22, 0
      %p126 = por %p124, %p125
      %s127 = ssub.s32 %s23, %s42
      %s128 = ssub.s32 %s24, %s38
      %s129 = sor.u32 %s127, %s128
      %s130 = ssub.s32 %s25, %s34
      %s131 = sor.u32 %s129, %s130
      %p132 = scmp.eq.s32.totalorder %s131, 0
      %s134 = sadd.s32 %s133, 1
      %s135 = scalar_select %p132, %s133, %s134
      %p138 = pneg %p132
      %p139 = scmp.eq.s32.totalorder %s16, 1
      %p140 = por %p138, %p139
      %p141 = scmp.ne.s32.totalorder %s133, %s136
      %p142 = scmp.eq.s32.totalorder %s16, 0
      %p143 = por %p141, %p142
      %p144 = scmp.ne.s32.totalorder %s133, %s136
      %p145 = scmp.eq.s32.totalorder %s21, 1
      %p146 = por %p144, %p145
      %p147 = scmp.ne.s32.totalorder %s136, %s137
      %p148 = scmp.eq.s32.totalorder %s21, 0
      %p149 = por %p147, %p148
      %p150 = scmp.ne.s32.totalorder %s136, %s137
      %p151 = scmp.eq.s32.totalorder %s22, 1
      %p152 = por %p150, %p151
      %p154 = scmp.ne.s32.totalorder %s137, %s153
      %p155 = scmp.eq.s32.totalorder %s22, 0
      %p156 = por %p154, %p155
      %p157 = scmp.le.s32.totalorder 1, %s16
      %p158 = scmp.lt.s32.totalorder %s16, 3
      %p159 = pnand %p157, %p158
      %p160 = pneg %p159
      // Predicated region
      $region9: #{tpu_custom_call.1} parent=5 // pred_check
        _
      $region10: #{tpu_custom_call.1} parent=5 // pred_check_branch
        %162 = sbr.rel (%p159) target = $region12
      $region11: #{tpu_custom_call.1} parent=5 // pred_region
        %s163 = ssub.s32 %s16, 1
      $region12: #{tpu_custom_call.1} parent=5 // pred_fallthru
        _
      %p164 = scmp.lt.s32.totalorder %s16, 2
      // Predicated region
      $region13: #{tpu_custom_call.1} parent=5 // pred_check
        %p165 = pneg %p164
      $region14: #{tpu_custom_call.1} parent=5 // pred_check_branch
        %167 = sbr.rel (%p165) target = $region16
      $region15: #{tpu_custom_call.1} parent=5 // pred_region
        // Predicated region
        $region17: #{tpu_custom_call.1} parent=15 // pred_check
          %p168 = pneg %p57
        $region18: #{tpu_custom_call.1} parent=15 // pred_check_branch
          %170 = sbr.rel (%p168) target = $region20
        $region19: #{tpu_custom_call.1} parent=15 // pred_region
          %s171 = smul.u32 16, %s24
          %p172 = scmp.lt.s32.totalorder %s23, 1
          %s173 = scalar_select %p172, %s23, 1
          %p174 = scmp.lt.s32.totalorder %s171, 15
          %s175 = scalar_select %p174, %s171, 15
          %s176 = smul.addr %s173, 16
          %s177 = sadd.s32 %s175, %s176
          %s178 = smul.addr %s177, 8
          %s179 = scalar_lea.vmem %s0, %s178
          %s180 = smul.u32 16, %s24
        $region20: #{tpu_custom_call.1} parent=15 // pred_fallthru
          _
        // Predicated region
        $region21: #{tpu_custom_call.1} parent=15 // pred_check
          %p181 = pneg %p85
        $region22: #{tpu_custom_call.1} parent=15 // pred_check_branch
          %183 = sbr.rel (%p181) target = $region24
        $region23: #{tpu_custom_call.1} parent=15 // pred_region
          %p184 = scmp.lt.s32.totalorder %s23, 1
          %s185 = scalar_select %p184, %s23, 1
          %p186 = scmp.lt.s32.totalorder %s25, 0
          %s187 = scalar_select %p186, %s25, 0
          %s188 = sadd.s32 %s187, %s185
          %s189 = smul.addr %s188, 8
          %s190 = scalar_lea.vmem %s1, %s189
        $region24: #{tpu_custom_call.1} parent=15 // pred_fallthru
          _
      $region16: #{tpu_custom_call.1} parent=5 // pred_fallthru
        _
      %p191 = scmp.le.s32.totalorder 1, %s16
      %p192 = scmp.lt.s32.totalorder %s16, 3
      %p193 = pnand %p191, %p192
      %p194 = pneg %p193
      // Predicated region
      $region25: #{tpu_custom_call.1} parent=5 // pred_check
        _
      $region26: #{tpu_custom_call.1} parent=5 // pred_check_branch
        %196 = sbr.rel (%p193) target = $region28
      $region27: #{tpu_custom_call.1} parent=5 // pred_region
        %s197 = ssub.s32 %s16, 1
        %s198 = smul.u32 16, %s27
        %p199 = scmp.lt.s32.totalorder %s26, 1
        %s200 = scalar_select %p199, %s26, 1
        %p201 = scmp.lt.s32.totalorder %s198, 15
        %s202 = scalar_select %p201, %s198, 15
        %s203 = smul.addr %s200, 16
        %s204 = sadd.s32 %s202, %s203
        %s205 = smul.addr %s204, 8
        %s206 = scalar_lea.vmem %s0, %s205
        %p207 = pneg %p63
        %p208 = pneg %p60
        %p209 = scmp.lt.s32.totalorder %s26, 1
        %s210 = scalar_select %p209, %s26, 1
        %p211 = scmp.lt.s32.totalorder %s28, 0
        %s212 = scalar_select %p211, %s28, 0
        %s213 = sadd.s32 %s212, %s210
        %s214 = smul.addr %s213, 8
        %s215 = scalar_lea.vmem %s1, %s214
        %p216 = pneg %p91
        %p217 = pneg %p88
        %p218 = pneg %p119
        %p219 = pneg %p116
        %s220 = sand.u32 %s106, 1
        %s221 = scalar_lea.sflag [#allocation4], %s220
        %s222 = sand.u32 %s106, 1
        %s223 = scalar_lea.vmem [#allocation3], %s222
        %p224 = pneg %p149
        %p225 = pneg %p146
        %s226 = sand.u32 %s136, 1
        %s227 = scalar_lea.sflag [#allocation6], %s226
        %s228 = sand.u32 %s136, 1
        %s229 = scalar_lea.vmem [#allocation5], %s228
        %s230 = smul.u32 16, %s27
        %p231 = scmp.lt.s32.totalorder %s26, 1
        %s232 = scalar_select %p231, %s26, 1
        %p233 = scmp.lt.s32.totalorder %s230, 15
        %s234 = scalar_select %p233, %s230, 15
        %s235 = smul.addr %s232, 16
        %s236 = sadd.s32 %s234, %s235
        %s237 = smul.addr %s236, 8
        %s238 = scalar_lea.vmem %s0, %s237
        %s239 = smul.u32 16, %s27
        %p240 = scmp.lt.s32.totalorder %s26, 1
        %s241 = scalar_select %p240, %s26, 1
        %p242 = scmp.lt.s32.totalorder %s28, 0
        %s243 = scalar_select %p242, %s28, 0
        %s244 = sadd.s32 %s243, %s241
        %s245 = smul.addr %s244, 8
        %s246 = scalar_lea.vmem %s1, %s245
        %v247 = vld [vmem:[%s238] sm:$0xff]
        %v248 = vld [vmem:[%s238 + $0x8] sm:$0xff]
        %v249 = vld [vmem:[%s238 + $0x10] sm:$0xff]
        %v250 = vld [vmem:[%s238 + $0x18] sm:$0xff]
        %v251 = vld [vmem:[%s238 + $0x20] sm:$0xff]
        %v252 = vld [vmem:[%s238 + $0x28] sm:$0xff]
        %v253 = vld [vmem:[%s238 + $0x30] sm:$0xff]
        %v254 = vld [vmem:[%s238 + $0x38] sm:$0xff]
        %v255 = vld [vmem:[%s238 + $0x40] sm:$0xff]
        %v256 = vld [vmem:[%s238 + $0x48] sm:$0xff]
        %v257 = vld [vmem:[%s238 + $0x50] sm:$0xff]
        %v258 = vld [vmem:[%s238 + $0x58] sm:$0xff]
        %v259 = vld [vmem:[%s238 + $0x60] sm:$0xff]
        %v260 = vld [vmem:[%s238 + $0x68] sm:$0xff]
        %v261 = vld [vmem:[%s238 + $0x70] sm:$0xff]
        %v262 = vld [vmem:[%s238 + $0x78] sm:$0xff]
        %v263 = vld [vmem:[%s246] sm:$0x1f]
        %vm264 = vcmask 39936
        %v266 = vsel %vm264, %v247, 0
        %v269 = vsel %vm264, %v248, 0
        %v272 = vsel %vm264, %v249, 0
        %v275 = vsel %vm264, %v250, 0
        %v278 = vsel %vm264, %v251, 0
        %v281 = vsel %vm264, %v252, 0
        %v284 = vsel %vm264, %v253, 0
        %v287 = vsel %vm264, %v254, 0
        %v290 = vsel %vm264, %v255, 0
        %v293 = vsel %vm264, %v256, 0
        %v296 = vsel %vm264, %v257, 0
        %v299 = vsel %vm264, %v258, 0
        %v302 = vsel %vm264, %v259, 0
        %v305 = vsel %vm264, %v260, 0
        %v308 = vsel %vm264, %v261, 0
        %v311 = vsel %vm264, %v262, 0
        %vm313 = vcmask 1044480
        %v315 = vsel %vm313, %v263, 0
        %317 = vmatprep.subr.mxu0 0.0
        %v318 = vand.u32 %v315, 4294901760
        %319 = vmatpush1.msra.mxu0 %v318
        %320 = vmatprep.subr.mxu0 0.0
        %321 = vmatpush1.msra.mxu0 0.0
        %322 = vmatprep.subr.mxu0 0.0
        %323 = vmatpush1.msra.mxu0 0.0
        %324 = vmatprep.subr.mxu0 0.0
        %325 = vmatpush1.msra.mxu0 0.0
        %326 = vmatprep.subr.mxu0 0.0
        %327 = vmatpush1.msra.mxu0 0.0
        %328 = vmatprep.subr.mxu0 0.0
        %329 = vmatpush1.msra.mxu0 0.0
        %330 = vmatprep.subr.mxu0 0.0
        %331 = vmatpush1.msra.mxu0 0.0
        %332 = vmatprep.subr.mxu0 0.0
        %333 = vmatpush1.msra.mxu0 0.0
        %334 = vmatprep.subr.mxu0 0.0
        %335 = vmatpush1.msra.mxu0 0.0
        %336 = vmatprep.subr.mxu0 0.0
        %337 = vmatpush1.msra.mxu0 0.0
        %338 = vmatprep.subr.mxu0 0.0
        %339 = vmatpush1.msra.mxu0 0.0
        %340 = vmatprep.subr.mxu0 0.0
        %341 = vmatpush1.msra.mxu0 0.0
        %342 = vmatprep.subr.mxu0 0.0
        %343 = vmatpush1.msra.mxu0 0.0
        %344 = vmatprep.subr.mxu0 0.0
        %345 = vmatpush1.msra.mxu0 0.0
        %346 = vmatprep.subr.mxu0 0.0
        %347 = vmatpush1.msra.mxu0 0.0
        %348 = vmatprep.subr.mxu0 0.0
        %349 = vmatpush1.msra.mxu0 0.0
        %350 = vmatprep.subr.mxu0 0.0
        %351 = vmatpush1.msra.mxu0 0.0
        %352 = vmatprep.subr.mxu0 0.0
        %353 = vmatpush1.msra.mxu0 0.0
        %354 = vmatprep.subr.mxu0 0.0
        %355 = vmatpush1.msra.mxu0 0.0
        %356 = vmatprep.subr.mxu0 0.0
        %357 = vmatpush1.msra.mxu0 0.0
        %358 = vmatprep.subr.mxu0 0.0
        %359 = vmatpush1.msra.mxu0 0.0
        %360 = vmatprep.subr.mxu0 0.0
        %361 = vmatpush1.msra.mxu0 0.0
        %362 = vmatprep.subr.mxu0 0.0
        %363 = vmatpush1.msra.mxu0 0.0
        %364 = vmatprep.subr.mxu0 0.0
        %365 = vmatpush1.msra.mxu0 0.0
        %366 = vmatprep.subr.mxu0 0.0
        %367 = vmatpush1.msra.mxu0 0.0
        %368 = vmatprep.subr.mxu0 0.0
        %369 = vmatpush1.msra.mxu0 0.0
        %370 = vmatprep.subr.mxu0 0.0
        %371 = vmatpush1.msra.mxu0 0.0
        %372 = vmatprep.subr.mxu0 0.0
        %373 = vmatpush1.msra.mxu0 0.0
        %374 = vmatprep.subr.mxu0 0.0
        %375 = vmatpush1.msra.mxu0 0.0
        %376 = vmatprep.subr.mxu0 0.0
        %377 = vmatpush1.msra.mxu0 0.0
        %378 = vmatprep.subr.mxu0 0.0
        %379 = vmatpush1.msra.mxu0 0.0
        %380 = vmatprep.subr.mxu0 0.0
        %381 = vmatpush1.msra.mxu0 0.0
        %382 = vmatprep.mubr.f32.mxu0 0.0
        %v383 = vand.u32 %v266, 4294901760
        %v384 = vsub.f32 %v266, %v383
        %v385 = vand.u32 %v384, 4294901760
        %v386 = vsub.f32 %v384, %v385
        %v387 = vand.u32 %v386, 4294901760
        %388 = vmatmul.mubr.f32.gmra.mrb[0].mxu0 %v387
        %v389 = vpop.f32.mrb[0].mxu0
        %v390 = vadd.f32 0.0, %v389
        %v391 = vpop.f32.mrb[0].mxu0
        %392 = vmatprep.mubr.f32.mxu0 0.0
        %v393 = vand.u32 %v269, 4294901760
        %v394 = vsub.f32 %v269, %v393
        %v395 = vand.u32 %v394, 4294901760
        %v396 = vsub.f32 %v394, %v395
        %v397 = vand.u32 %v396, 4294901760
        %398 = vmatmul.mubr.f32.gmra.mrb[0].mxu0 %v397
        %v399 = vpop.f32.mrb[0].mxu0
        %v400 = vadd.f32 0.0, %v399
        %v401 = vpop.f32.mrb[0].mxu0
        %402 = vmatprep.mubr.f32.mxu0 0.0
        %v403 = vand.u32 %v272, 4294901760
        %v404 = vsub.f32 %v272, %v403
        %v405 = vand.u32 %v404, 4294901760
        %v406 = vsub.f32 %v404, %v405
        %v407 = vand.u32 %v406, 4294901760
        %408 = vmatmul.mubr.f32.gmra.mrb[0].mxu0 %v407
        %v409 = vpop.f32.mrb[0].mxu0
        %v410 = vadd.f32 0.0, %v409
        %v411 = vpop.f32.mrb[0].mxu0
        %412 = vmatprep.mubr.f32.mxu0 0.0
        %v413 = vand.u32 %v275, 4294901760
        %v414 = vsub.f32 %v275, %v413
        %v415 = vand.u32 %v414, 4294901760
        %v416 = vsub.f32 %v414, %v415
        %v417 = vand.u32 %v416, 4294901760
        %418 = vmatmul.mubr.f32.gmra.mrb[0].mxu0 %v417
        %v419 = vpop.f32.mrb[0].mxu0
        %v420 = vadd.f32 0.0, %v419
        %v421 = vpop.f32.mrb[0].mxu0
        %422 = vmatprep.mubr.f32.mxu0 0.0
        %v423 = vand.u32 %v278, 4294901760
        %v424 = vsub.f32 %v278, %v423
        %v425 = vand.u32 %v424, 4294901760
        %v426 = vsub.f32 %v424, %v425
        %v427 = vand.u32 %v426, 4294901760
        %428 = vmatmul.mubr.f32.gmra.mrb[0].mxu0 %v427
        %v429 = vpop.f32.mrb[0].mxu0
        %v430 = vadd.f32 0.0, %v429
        %v431 = vpop.f32.mrb[0].mxu0
        %432 = vmatprep.mubr.f32.mxu0 0.0
        %v433 = vand.u32 %v281, 4294901760
        %v434 = vsub.f32 %v281, %v433
        %v435 = vand.u32 %v434, 4294901760
        %v436 = vsub.f32 %v434, %v435
        %v437 = vand.u32 %v436, 4294901760
        %438 = vmatmul.mubr.f32.gmra.mrb[0].mxu0 %v437
        %v439 = vpop.f32.mrb[0].mxu0
        %v440 = vadd.f32 0.0, %v439
        %v441 = vpop.f32.mrb[0].mxu0
        %442 = vmatprep.mubr.f32.mxu0 0.0
        %v443 = vand.u32 %v284, 4294901760
        %v444 = vsub.f32 %v284, %v443
        %v445 = vand.u32 %v444, 4294901760
        %v446 = vsub.f32 %v444, %v445
        %v447 = vand.u32 %v446, 4294901760
        %448 = vmatmul.mubr.f32.gmra.mrb[0].mxu0 %v447
        %v449 = vpop.f32.mrb[0].mxu0
        %v450 = vadd.f32 0.0, %v449
        %v451 = vpop.f32.mrb[0].mxu0
        %452 = vmatprep.mubr.f32.mxu0 0.0
        %v453 = vand.u32 %v287, 4294901760
        %v454 = vsub.f32 %v287, %v453
        %v455 = vand.u32 %v454, 4294901760
        %v456 = vsub.f32 %v454, %v455
        %v457 = vand.u32 %v456, 4294901760
        %458 = vmatmul.mubr.f32.gmra.mrb[0].mxu0 %v457
        %v459 = vpop.f32.mrb[0].mxu0
        %v460 = vadd.f32 0.0, %v459
        %v461 = vpop.f32.mrb[0].mxu0
        %462 = vmatprep.mubr.f32.mxu0 0.0
        %v463 = vand.u32 %v290, 4294901760
        %v464 = vsub.f32 %v290, %v463
        %v465 = vand.u32 %v464, 4294901760
        %v466 = vsub.f32 %v464, %v465
        %v467 = vand.u32 %v466, 4294901760
        %468 = vmatmul.mubr.f32.gmra.mrb[0].mxu0 %v467
        %v469 = vpop.f32.mrb[0].mxu0
        %v470 = vadd.f32 0.0, %v469
        %v471 = vpop.f32.mrb[0].mxu0
        %472 = vmatprep.mubr.f32.mxu0 0.0
        %v473 = vand.u32 %v293, 4294901760
        %v474 = vsub.f32 %v293, %v473
        %v475 = vand.u32 %v474, 4294901760
        %v476 = vsub.f32 %v474, %v475
        %v477 = vand.u32 %v476, 4294901760
        %478 = vmatmul.mubr.f32.gmra.mrb[0].mxu0 %v477
        %v479 = vpop.f32.mrb[0].mxu0
        %v480 = vadd.f32 0.0, %v479
        %v481 = vpop.f32.mrb[0].mxu0
        %482 = vmatprep.mubr.f32.mxu0 0.0
        %v483 = vand.u32 %v296, 4294901760
        %v484 = vsub.f32 %v296, %v483
        %v485 = vand.u32 %v484, 4294901760
        %v486 = vsub.f32 %v484, %v485
        %v487 = vand.u32 %v486, 4294901760
        %488 = vmatmul.mubr.f32.gmra.mrb[0].mxu0 %v487
        %v489 = vpop.f32.mrb[0].mxu0
        %v490 = vadd.f32 0.0, %v489
        %v491 = vpop.f32.mrb[0].mxu0
        %492 = vmatprep.mubr.f32.mxu0 0.0
        %v493 = vand.u32 %v299, 4294901760
        %v494 = vsub.f32 %v299, %v493
        %v495 = vand.u32 %v494, 4294901760
        %v496 = vsub.f32 %v494, %v495
        %v497 = vand.u32 %v496, 4294901760
        %498 = vmatmul.mubr.f32.gmra.mrb[0].mxu0 %v497
        %v499 = vpop.f32.mrb[0].mxu0
        %v500 = vadd.f32 0.0, %v499
        %v501 = vpop.f32.mrb[0].mxu0
        %502 = vmatprep.mubr.f32.mxu0 0.0
        %v503 = vand.u32 %v302, 4294901760
        %v504 = vsub.f32 %v302, %v503
        %v505 = vand.u32 %v504, 4294901760
        %v506 = vsub.f32 %v504, %v505
        %v507 = vand.u32 %v506, 4294901760
        %508 = vmatmul.mubr.f32.gmra.mrb[0].mxu0 %v507
        %v509 = vpop.f32.mrb[0].mxu0
        %v510 = vadd.f32 0.0, %v509
        %v511 = vpop.f32.mrb[0].mxu0
        %512 = vmatprep.mubr.f32.mxu0 0.0
        %v513 = vand.u32 %v305, 4294901760
        %v514 = vsub.f32 %v305, %v513
        %v515 = vand.u32 %v514, 4294901760
        %v516 = vsub.f32 %v514, %v515
        %v517 = vand.u32 %v516, 4294901760
        %518 = vmatmul.mubr.f32.gmra.mrb[0].mxu0 %v517
        %v519 = vpop.f32.mrb[0].mxu0
        %v520 = vadd.f32 0.0, %v519
        %v521 = vpop.f32.mrb[0].mxu0
        %522 = vmatprep.mubr.f32.mxu0 0.0
        %v523 = vand.u32 %v308, 4294901760
        %v524 = vsub.f32 %v308, %v523
        %v525 = vand.u32 %v524, 4294901760
        %v526 = vsub.f32 %v524, %v525
        %v527 = vand.u32 %v526, 4294901760
        %528 = vmatmul.mubr.f32.gmra.mrb[0].mxu0 %v527
        %v529 = vpop.f32.mrb[0].mxu0
        %v530 = vadd.f32 0.0, %v529
        %v531 = vpop.f32.mrb[0].mxu0
        %532 = vmatprep.mubr.f32.mxu0 0.0
        %v533 = vand.u32 %v311, 4294901760
        %v534 = vsub.f32 %v311, %v533
        %v535 = vand.u32 %v534, 4294901760
        %v536 = vsub.f32 %v534, %v535
        %v537 = vand.u32 %v536, 4294901760
        %538 = vmatmul.mubr.f32.gmra.mrb[0].mxu0 %v537
        %v539 = vpop.f32.mrb[0].mxu0
        %v540 = vadd.f32 0.0, %v539
        %v541 = vpop.f32.mrb[0].mxu0
        %542 = vdwg.mxu0
        %543 = vmatprep.subr.mxu0 0.0
        %v544 = vand.u32 %v315, 4294901760
        %v545 = vsub.f32 %v315, %v544
        %v546 = vand.u32 %v545, 4294901760
        %v547 = vsub.f32 %v545, %v546
        %v548 = vand.u32 %v547, 4294901760
        %549 = vmatpush1.msra.mxu0 %v548
        %550 = vmatprep.subr.mxu0 0.0
        %551 = vmatpush1.msra.mxu0 0.0
        %552 = vmatprep.subr.mxu0 0.0
        %553 = vmatpush1.msra.mxu0 0.0
        %554 = vmatprep.subr.mxu0 0.0
        %555 = vmatpush1.msra.mxu0 0.0
        %556 = vmatprep.subr.mxu0 0.0
        %557 = vmatpush1.msra.mxu0 0.0
        %558 = vmatprep.subr.mxu0 0.0
        %559 = vmatpush1.msra.mxu0 0.0
        %560 = vmatprep.subr.mxu0 0.0
        %561 = vmatpush1.msra.mxu0 0.0
        %562 = vmatprep.subr.mxu0 0.0
        %563 = vmatpush1.msra.mxu0 0.0
        %564 = vmatprep.subr.mxu0 0.0
        %565 = vmatpush1.msra.mxu0 0.0
        %566 = vmatprep.subr.mxu0 0.0
        %567 = vmatpush1.msra.mxu0 0.0
        %568 = vmatprep.subr.mxu0 0.0
        %569 = vmatpush1.msra.mxu0 0.0
        %570 = vmatprep.subr.mxu0 0.0
        %571 = vmatpush1.msra.mxu0 0.0
        %572 = vmatprep.subr.mxu0 0.0
        %573 = vmatpush1.msra.mxu0 0.0
        %574 = vmatprep.subr.mxu0 0.0
        %575 = vmatpush1.msra.mxu0 0.0
        %576 = vmatprep.subr.mxu0 0.0
        %577 = vmatpush1.msra.mxu0 0.0
        %578 = vmatprep.subr.mxu0 0.0
        %579 = vmatpush1.msra.mxu0 0.0
        %580 = vmatprep.subr.mxu0 0.0
        %581 = vmatpush1.msra.mxu0 0.0
        %582 = vmatprep.subr.mxu0 0.0
        %583 = vmatpush1.msra.mxu0 0.0
        %584 = vmatprep.subr.mxu0 0.0
        %585 = vmatpush1.msra.mxu0 0.0
        %586 = vmatprep.subr.mxu0 0.0
        %587 = vmatpush1.msra.mxu0 0.0
        %588 = vmatprep.subr.mxu0 0.0
        %589 = vmatpush1.msra.mxu0 0.0
        %590 = vmatprep.subr.mxu0 0.0
        %591 = vmatpush1.msra.mxu0 0.0
        %592 = vmatprep.subr.mxu0 0.0
        %593 = vmatpush1.msra.mxu0 0.0
        %594 = vmatprep.subr.mxu0 0.0
        %595 = vmatpush1.msra.mxu0 0.0
        %596 = vmatprep.subr.mxu0 0.0
        %597 = vmatpush1.msra.mxu0 0.0
        %598 = vmatprep.subr.mxu0 0.0
        %599 = vmatpush1.msra.mxu0 0.0
        %600 = vmatprep.subr.mxu0 0.0
        %601 = vmatpush1.msra.mxu0 0.0
        %602 = vmatprep.subr.mxu0 0.0
        %603 = vmatpush1.msra.mxu0 0.0
        %604 = vmatprep.subr.mxu0 0.0
        %605 = vmatpush1.msra.mxu0 0.0
        %606 = vmatprep.subr.mxu0 0.0
        %607 = vmatpush1.msra.mxu0 0.0
        %608 = vmatprep.subr.mxu0 0.0
        %609 = vmatpush1.msra.mxu0 0.0
        %610 = vmatprep.subr.mxu0 0.0
        %611 = vmatpush1.msra.mxu0 0.0
        %612 = vmatprep.mubr.f32.mxu0 0.0
        %v613 = vand.u32 %v266, 4294901760
        %614 = vmatmul.mubr.f32.gmra.mrb[0].mxu0 %v613
        %v615 = vpop.f32.mrb[0].mxu0
        %v616 = vadd.f32 %v390, %v615
        %v617 = vpop.f32.mrb[0].mxu0
        %618 = vmatprep.mubr.f32.mxu0 0.0
        %v619 = vand.u32 %v269, 4294901760
        %620 = vmatmul.mubr.f32.gmra.mrb[0].mxu0 %v619
        %v621 = vpop.f32.mrb[0].mxu0
        %v622 = vadd.f32 %v400, %v621
        %v623 = vpop.f32.mrb[0].mxu0
        %624 = vmatprep.mubr.f32.mxu0 0.0
        %v625 = vand.u32 %v272, 4294901760
        %626 = vmatmul.mubr.f32.gmra.mrb[0].mxu0 %v625
        %v627 = vpop.f32.mrb[0].mxu0
        %v628 = vadd.f32 %v410, %v627
        %v629 = vpop.f32.mrb[0].mxu0
        %630 = vmatprep.mubr.f32.mxu0 0.0
        %v631 = vand.u32 %v275, 4294901760
        %632 = vmatmul.mubr.f32.gmra.mrb[0].mxu0 %v631
        %v633 = vpop.f32.mrb[0].mxu0
        %v634 = vadd.f32 %v420, %v633
        %v635 = vpop.f32.mrb[0].mxu0
        %636 = vmatprep.mubr.f32.mxu0 0.0
        %v637 = vand.u32 %v278, 4294901760
        %638 = vmatmul.mubr.f32.gmra.mrb[0].mxu0 %v637
        %v639 = vpop.f32.mrb[0].mxu0
        %v640 = vadd.f32 %v430, %v639
        %v641 = vpop.f32.mrb[0].mxu0
        %642 = vmatprep.mubr.f32.mxu0 0.0
        %v643 = vand.u32 %v281, 4294901760
        %644 = vmatmul.mubr.f32.gmra.mrb[0].mxu0 %v643
        %v645 = vpop.f32.mrb[0].mxu0
        %v646 = vadd.f32 %v440, %v645
        %v647 = vpop.f32.mrb[0].mxu0
        %648 = vmatprep.mubr.f32.mxu0 0.0
        %v649 = vand.u32 %v284, 4294901760
        %650 = vmatmul.mubr.f32.gmra.mrb[0].mxu0 %v649
        %v651 = vpop.f32.mrb[0].mxu0
        %v652 = vadd.f32 %v450, %v651
        %v653 = vpop.f32.mrb[0].mxu0
        %654 = vmatprep.mubr.f32.mxu0 0.0
        %v655 = vand.u32 %v287, 4294901760
        %656 = vmatmul.mubr.f32.gmra.mrb[0].mxu0 %v655
        %v657 = vpop.f32.mrb[0].mxu0
        %v658 = vadd.f32 %v460, %v657
        %v659 = vpop.f32.mrb[0].mxu0
        %660 = vmatprep.mubr.f32.mxu0 0.0
        %v661 = vand.u32 %v290, 4294901760
        %662 = vmatmul.mubr.f32.gmra.mrb[0].mxu0 %v661
        %v663 = vpop.f32.mrb[0].mxu0
        %v664 = vadd.f32 %v470, %v663
        %v665 = vpop.f32.mrb[0].mxu0
        %666 = vmatprep.mubr.f32.mxu0 0.0
        %v667 = vand.u32 %v293, 4294901760
        %668 = vmatmul.mubr.f32.gmra.mrb[0].mxu0 %v667
        %v669 = vpop.f32.mrb[0].mxu0
        %v670 = vadd.f32 %v480, %v669
        %v671 = vpop.f32.mrb[0].mxu0
        %672 = vmatprep.mubr.f32.mxu0 0.0
        %v673 = vand.u32 %v296, 4294901760
        %674 = vmatmul.mubr.f32.gmra.mrb[0].mxu0 %v673
        %v675 = vpop.f32.mrb[0].mxu0
        %v676 = vadd.f32 %v490, %v675
        %v677 = vpop.f32.mrb[0].mxu0
        %678 = vmatprep.mubr.f32.mxu0 0.0
        %v679 = vand.u32 %v299, 4294901760
        %680 = vmatmul.mubr.f32.gmra.mrb[0].mxu0 %v679
        %v681 = vpop.f32.mrb[0].mxu0
        %v682 = vadd.f32 %v500, %v681
        %v683 = vpop.f32.mrb[0].mxu0
        %684 = vmatprep.mubr.f32.mxu0 0.0
        %v685 = vand.u32 %v302, 4294901760
        %686 = vmatmul.mubr.f32.gmra.mrb[0].mxu0 %v685
        %v687 = vpop.f32.mrb[0].mxu0
        %v688 = vadd.f32 %v510, %v687
        %v689 = vpop.f32.mrb[0].mxu0
        %690 = vmatprep.mubr.f32.mxu0 0.0
        %v691 = vand.u32 %v305, 4294901760
        %692 = vmatmul.mubr.f32.gmra.mrb[0].mxu0 %v691
        %v693 = vpop.f32.mrb[0].mxu0
        %v694 = vadd.f32 %v520, %v693
        %v695 = vpop.f32.mrb[0].mxu0
        %696 = vmatprep.mubr.f32.mxu0 0.0
        %v697 = vand.u32 %v308, 4294901760
        %698 = vmatmul.mubr.f32.gmra.mrb[0].mxu0 %v697
        %v699 = vpop.f32.mrb[0].mxu0
        %v700 = vadd.f32 %v530, %v699
        %v701 = vpop.f32.mrb[0].mxu0
        %702 = vmatprep.mubr.f32.mxu0 0.0
        %v703 = vand.u32 %v311, 4294901760
        %704 = vmatmul.mubr.f32.gmra.mrb[0].mxu0 %v703
        %v705 = vpop.f32.mrb[0].mxu0
        %v706 = vadd.f32 %v540, %v705
        %v707 = vpop.f32.mrb[0].mxu0
        %708 = vdwg.mxu0
        %709 = vmatprep.subr.mxu0 0.0
        %v710 = vand.u32 %v315, 4294901760
        %v711 = vsub.f32 %v315, %v710
        %712 = vmatpush1.msra.mxu0 %v711
        %713 = vmatprep.subr.mxu0 0.0
        %714 = vmatpush1.msra.mxu0 0.0
        %715 = vmatprep.subr.mxu0 0.0
        %716 = vmatpush1.msra.mxu0 0.0
        %717 = vmatprep.subr.mxu0 0.0
        %718 = vmatpush1.msra.mxu0 0.0
        %719 = vmatprep.subr.mxu0 0.0
        %720 = vmatpush1.msra.mxu0 0.0
        %721 = vmatprep.subr.mxu0 0.0
        %722 = vmatpush1.msra.mxu0 0.0
        %723 = vmatprep.subr.mxu0 0.0
        %724 = vmatpush1.msra.mxu0 0.0
        %725 = vmatprep.subr.mxu0 0.0
        %726 = vmatpush1.msra.mxu0 0.0
        %727 = vmatprep.subr.mxu0 0.0
        %728 = vmatpush1.msra.mxu0 0.0
        %729 = vmatprep.subr.mxu0 0.0
        %730 = vmatpush1.msra.mxu0 0.0
        %731 = vmatprep.subr.mxu0 0.0
        %732 = vmatpush1.msra.mxu0 0.0
        %733 = vmatprep.subr.mxu0 0.0
        %734 = vmatpush1.msra.mxu0 0.0
        %735 = vmatprep.subr.mxu0 0.0
        %736 = vmatpush1.msra.mxu0 0.0
        %737 = vmatprep.subr.mxu0 0.0
        %738 = vmatpush1.msra.mxu0 0.0
        %739 = vmatprep.subr.mxu0 0.0
        %740 = vmatpush1.msra.mxu0 0.0
        %741 = vmatprep.subr.mxu0 0.0
        %742 = vmatpush1.msra.mxu0 0.0
        %743 = vmatprep.subr.mxu0 0.0
        %744 = vmatpush1.msra.mxu0 0.0
        %745 = vmatprep.subr.mxu0 0.0
        %746 = vmatpush1.msra.mxu0 0.0
        %747 = vmatprep.subr.mxu0 0.0
        %748 = vmatpush1.msra.mxu0 0.0
        %749 = vmatprep.subr.mxu0 0.0
        %750 = vmatpush1.msra.mxu0 0.0
        %751 = vmatprep.subr.mxu0 0.0
        %752 = vmatpush1.msra.mxu0 0.0
        %753 = vmatprep.subr.mxu0 0.0
        %754 = vmatpush1.msra.mxu0 0.0
        %755 = vmatprep.subr.mxu0 0.0
        %756 = vmatpush1.msra.mxu0 0.0
        %757 = vmatprep.subr.mxu0 0.0
        %758 = vmatpush1.msra.mxu0 0.0
        %759 = vmatprep.subr.mxu0 0.0
        %760 = vmatpush1.msra.mxu0 0.0
        %761 = vmatprep.subr.mxu0 0.0
        %762 = vmatpush1.msra.mxu0 0.0
        %763 = vmatprep.subr.mxu0 0.0
        %764 = vmatpush1.msra.mxu0 0.0
        %765 = vmatprep.subr.mxu0 0.0
        %766 = vmatpush1.msra.mxu0 0.0
        %767 = vmatprep.subr.mxu0 0.0
        %768 = vmatpush1.msra.mxu0 0.0
        %769 = vmatprep.subr.mxu0 0.0
        %770 = vmatpush1.msra.mxu0 0.0
        %771 = vmatprep.subr.mxu0 0.0
        %772 = vmatpush1.msra.mxu0 0.0
        %773 = vmatprep.subr.mxu0 0.0
        %774 = vmatpush1.msra.mxu0 0.0
        %775 = vmatprep.mubr.f32.mxu0 0.0
        %v776 = vand.u32 %v266, 4294901760
        %v777 = vsub.f32 %v266, %v776
        %778 = vmatmul.mubr.f32.gmra.mrb[0].mxu0 %v777
        %v779 = vpop.f32.mrb[0].mxu0
        %v780 = vadd.f32 %v616, %v779
        %v781 = vpop.f32.mrb[0].mxu0
        %782 = vmatprep.mubr.f32.mxu0 0.0
        %v783 = vand.u32 %v269, 4294901760
        %v784 = vsub.f32 %v269, %v783
        %785 = vmatmul.mubr.f32.gmra.mrb[0].mxu0 %v784
        %v786 = vpop.f32.mrb[0].mxu0
        %v787 = vadd.f32 %v622, %v786
        %v788 = vpop.f32.mrb[0].mxu0
        %789 = vmatprep.mubr.f32.mxu0 0.0
        %v790 = vand.u32 %v272, 4294901760
        %v791 = vsub.f32 %v272, %v790
        %792 = vmatmul.mubr.f32.gmra.mrb[0].mxu0 %v791
        %v793 = vpop.f32.mrb[0].mxu0
        %v794 = vadd.f32 %v628, %v793
        %v795 = vpop.f32.mrb[0].mxu0
        %796 = vmatprep.mubr.f32.mxu0 0.0
        %v797 = vand.u32 %v275, 4294901760
        %v798 = vsub.f32 %v275, %v797
        %799 = vmatmul.mubr.f32.gmra.mrb[0].mxu0 %v798
        %v800 = vpop.f32.mrb[0].mxu0
        %v801 = vadd.f32 %v634, %v800
        %v802 = vpop.f32.mrb[0].mxu0
        %803 = vmatprep.mubr.f32.mxu0 0.0
        %v804 = vand.u32 %v278, 4294901760
        %v805 = vsub.f32 %v278, %v804
        %806 = vmatmul.mubr.f32.gmra.mrb[0].mxu0 %v805
        %v807 = vpop.f32.mrb[0].mxu0
        %v808 = vadd.f32 %v640, %v807
        %v809 = vpop.f32.mrb[0].mxu0
        %810 = vmatprep.mubr.f32.mxu0 0.0
        %v811 = vand.u32 %v281, 4294901760
        %v812 = vsub.f32 %v281, %v811
        %813 = vmatmul.mubr.f32.gmra.mrb[0].mxu0 %v812
        %v814 = vpop.f32.mrb[0].mxu0
        %v815 = vadd.f32 %v646, %v814
        %v816 = vpop.f32.mrb[0].mxu0
        %817 = vmatprep.mubr.f32.mxu0 0.0
        %v818 = vand.u32 %v284, 4294901760
        %v819 = vsub.f32 %v284, %v818
        %820 = vmatmul.mubr.f32.gmra.mrb[0].mxu0 %v819
        %v821 = vpop.f32.mrb[0].mxu0
        %v822 = vadd.f32 %v652, %v821
        %v823 = vpop.f32.mrb[0].mxu0
        %824 = vmatprep.mubr.f32.mxu0 0.0
        %v825 = vand.u32 %v287, 4294901760
        %v826 = vsub.f32 %v287, %v825
        %827 = vmatmul.mubr.f32.gmra.mrb[0].mxu0 %v826
        %v828 = vpop.f32.mrb[0].mxu0
        %v829 = vadd.f32 %v658, %v828
        %v830 = vpop.f32.mrb[0].mxu0
        %831 = vmatprep.mubr.f32.mxu0 0.0
        %v832 = vand.u32 %v290, 4294901760
        %v833 = vsub.f32 %v290, %v832
        %834 = vmatmul.mubr.f32.gmra.mrb[0].mxu0 %v833
        %v835 = vpop.f32.mrb[0].mxu0
        %v836 = vadd.f32 %v664, %v835
        %v837 = vpop.f32.mrb[0].mxu0
        %838 = vmatprep.mubr.f32.mxu0 0.0
        %v839 = vand.u32 %v293, 4294901760
        %v840 = vsub.f32 %v293, %v839
        %841 = vmatmul.mubr.f32.gmra.mrb[0].mxu0 %v840
        %v842 = vpop.f32.mrb[0].mxu0
        %v843 = vadd.f32 %v670, %v842
        %v844 = vpop.f32.mrb[0].mxu0
        %845 = vmatprep.mubr.f32.mxu0 0.0
        %v846 = vand.u32 %v296, 4294901760
        %v847 = vsub.f32 %v296, %v846
        %848 = vmatmul.mubr.f32.gmra.mrb[0].mxu0 %v847
        %v849 = vpop.f32.mrb[0].mxu0
        %v850 = vadd.f32 %v676, %v849
        %v851 = vpop.f32.mrb[0].mxu0
        %852 = vmatprep.mubr.f32.mxu0 0.0
        %v853 = vand.u32 %v299, 4294901760
        %v854 = vsub.f32 %v299, %v853
        %855 = vmatmul.mubr.f32.gmra.mrb[0].mxu0 %v854
        %v856 = vpop.f32.mrb[0].mxu0
        %v857 = vadd.f32 %v682, %v856
        %v858 = vpop.f32.mrb[0].mxu0
        %859 = vmatprep.mubr.f32.mxu0 0.0
        %v860 = vand.u32 %v302, 4294901760
        %v861 = vsub.f32 %v302, %v860
        %862 = vmatmul.mubr.f32.gmra.mrb[0].mxu0 %v861
        %v863 = vpop.f32.mrb[0].mxu0
        %v864 = vadd.f32 %v688, %v863
        %v865 = vpop.f32.mrb[0].mxu0
        %866 = vmatprep.mubr.f32.mxu0 0.0
        %v867 = vand.u32 %v305, 4294901760
        %v868 = vsub.f32 %v305, %v867
        %869 = vmatmul.mubr.f32.gmra.mrb[0].mxu0 %v868
        %v870 = vpop.f32.mrb[0].mxu0
        %v871 = vadd.f32 %v694, %v870
        %v872 = vpop.f32.mrb[0].mxu0
        %873 = vmatprep.mubr.f32.mxu0 0.0
        %v874 = vand.u32 %v308, 4294901760
        %v875 = vsub.f32 %v308, %v874
        %876 = vmatmul.mubr.f32.gmra.mrb[0].mxu0 %v875
        %v877 = vpop.f32.mrb[0].mxu0
        %v878 = vadd.f32 %v700, %v877
        %v879 = vpop.f32.mrb[0].mxu0
        %880 = vmatprep.mubr.f32.mxu0 0.0
        %v881 = vand.u32 %v311, 4294901760
        %v882 = vsub.f32 %v311, %v881
        %883 = vmatmul.mubr.f32.gmra.mrb[0].mxu0 %v882
        %v884 = vpop.f32.mrb[0].mxu0
        %v885 = vadd.f32 %v706, %v884
        %v886 = vpop.f32.mrb[0].mxu0
        %887 = vdwg.mxu0
        %888 = vmatprep.subr.mxu0 0.0
        %v889 = vand.u32 %v315, 4294901760
        %890 = vmatpush1.msra.mxu0 %v889
        %891 = vmatprep.subr.mxu0 0.0
        %892 = vmatpush1.msra.mxu0 0.0
        %893 = vmatprep.subr.mxu0 0.0
        %894 = vmatpush1.msra.mxu0 0.0
        %895 = vmatprep.subr.mxu0 0.0
        %896 = vmatpush1.msra.mxu0 0.0
        %897 = vmatprep.subr.mxu0 0.0
        %898 = vmatpush1.msra.mxu0 0.0
        %899 = vmatprep.subr.mxu0 0.0
        %900 = vmatpush1.msra.mxu0 0.0
        %901 = vmatprep.subr.mxu0 0.0
        %902 = vmatpush1.msra.mxu0 0.0
        %903 = vmatprep.subr.mxu0 0.0
        %904 = vmatpush1.msra.mxu0 0.0
        %905 = vmatprep.subr.mxu0 0.0
        %906 = vmatpush1.msra.mxu0 0.0
        %907 = vmatprep.subr.mxu0 0.0
        %908 = vmatpush1.msra.mxu0 0.0
        %909 = vmatprep.subr.mxu0 0.0
        %910 = vmatpush1.msra.mxu0 0.0
        %911 = vmatprep.subr.mxu0 0.0
        %912 = vmatpush1.msra.mxu0 0.0
        %913 = vmatprep.subr.mxu0 0.0
        %914 = vmatpush1.msra.mxu0 0.0
        %915 = vmatprep.subr.mxu0 0.0
        %916 = vmatpush1.msra.mxu0 0.0
        %917 = vmatprep.subr.mxu0 0.0
        %918 = vmatpush1.msra.mxu0 0.0
        %919 = vmatprep.subr.mxu0 0.0
        %920 = vmatpush1.msra.mxu0 0.0
        %921 = vmatprep.subr.mxu0 0.0
        %922 = vmatpush1.msra.mxu0 0.0
        %923 = vmatprep.subr.mxu0 0.0
        %924 = vmatpush1.msra.mxu0 0.0
        %925 = vmatprep.subr.mxu0 0.0
        %926 = vmatpush1.msra.mxu0 0.0
        %927 = vmatprep.subr.mxu0 0.0
        %928 = vmatpush1.msra.mxu0 0.0
        %929 = vmatprep.subr.mxu0 0.0
        %930 = vmatpush1.msra.mxu0 0.0
        %931 = vmatprep.subr.mxu0 0.0
        %932 = vmatpush1.msra.mxu0 0.0
        %933 = vmatprep.subr.mxu0 0.0
        %934 = vmatpush1.msra.mxu0 0.0
        %935 = vmatprep.subr.mxu0 0.0
        %936 = vmatpush1.msra.mxu0 0.0
        %937 = vmatprep.subr.mxu0 0.0
        %938 = vmatpush1.msra.mxu0 0.0
        %939 = vmatprep.subr.mxu0 0.0
        %940 = vmatpush1.msra.mxu0 0.0
        %941 = vmatprep.subr.mxu0 0.0
        %942 = vmatpush1.msra.mxu0 0.0
        %943 = vmatprep.subr.mxu0 0.0
        %944 = vmatpush1.msra.mxu0 0.0
        %945 = vmatprep.subr.mxu0 0.0
        %946 = vmatpush1.msra.mxu0 0.0
        %947 = vmatprep.subr.mxu0 0.0
        %948 = vmatpush1.msra.mxu0 0.0
        %949 = vmatprep.subr.mxu0 0.0
        %950 = vmatpush1.msra.mxu0 0.0
        %951 = vmatprep.subr.mxu0 0.0
        %952 = vmatpush1.msra.mxu0 0.0
        %953 = vmatprep.mubr.f32.mxu0 0.0
        %v954 = vand.u32 %v266, 4294901760
        %v955 = vsub.f32 %v266, %v954
        %v956 = vand.u32 %v955, 4294901760
        %957 = vmatmul.mubr.f32.gmra.mrb[0].mxu0 %v956
        %v958 = vpop.f32.mrb[0].mxu0
        %v959 = vadd.f32 %v780, %v958
        %v960 = vpop.f32.mrb[0].mxu0
        %961 = vmatprep.mubr.f32.mxu0 0.0
        %v962 = vand.u32 %v269, 4294901760
        %v963 = vsub.f32 %v269, %v962
        %v964 = vand.u32 %v963, 4294901760
        %965 = vmatmul.mubr.f32.gmra.mrb[0].mxu0 %v964
        %v966 = vpop.f32.mrb[0].mxu0
        %v967 = vadd.f32 %v787, %v966
        %v968 = vpop.f32.mrb[0].mxu0
        %969 = vmatprep.mubr.f32.mxu0 0.0
        %v970 = vand.u32 %v272, 4294901760
        %v971 = vsub.f32 %v272, %v970
        %v972 = vand.u32 %v971, 4294901760
        %973 = vmatmul.mubr.f32.gmra.mrb[0].mxu0 %v972
        %v974 = vpop.f32.mrb[0].mxu0
        %v975 = vadd.f32 %v794, %v974
        %v976 = vpop.f32.mrb[0].mxu0
        %977 = vmatprep.mubr.f32.mxu0 0.0
        %v978 = vand.u32 %v275, 4294901760
        %v979 = vsub.f32 %v275, %v978
        %v980 = vand.u32 %v979, 4294901760
        %981 = vmatmul.mubr.f32.gmra.mrb[0].mxu0 %v980
        %v982 = vpop.f32.mrb[0].mxu0
        %v983 = vadd.f32 %v801, %v982
        %v984 = vpop.f32.mrb[0].mxu0
        %985 = vmatprep.mubr.f32.mxu0 0.0
        %v986 = vand.u32 %v278, 4294901760
        %v987 = vsub.f32 %v278, %v986
        %v988 = vand.u32 %v987, 4294901760
        %989 = vmatmul.mubr.f32.gmra.mrb[0].mxu0 %v988
        %v990 = vpop.f32.mrb[0].mxu0
        %v991 = vadd.f32 %v808, %v990
        %v992 = vpop.f32.mrb[0].mxu0
        %993 = vmatprep.mubr.f32.mxu0 0.0
        %v994 = vand.u32 %v281, 4294901760
        %v995 = vsub.f32 %v281, %v994
        %v996 = vand.u32 %v995, 4294901760
        %997 = vmatmul.mubr.f32.gmra.mrb[0].mxu0 %v996
        %v998 = vpop.f32.mrb[0].mxu0
        %v999 = vadd.f32 %v815, %v998
        %v1000 = vpop.f32.mrb[0].mxu0
        %1001 = vmatprep.mubr.f32.mxu0 0.0
        %v1002 = vand.u32 %v284, 4294901760
        %v1003 = vsub.f32 %v284, %v1002
        %v1004 = vand.u32 %v1003, 4294901760
        %1005 = vmatmul.mubr.f32.gmra.mrb[0].mxu0 %v1004
        %v1006 = vpop.f32.mrb[0].mxu0
        %v1007 = vadd.f32 %v822, %v1006
        %v1008 = vpop.f32.mrb[0].mxu0
        %1009 = vmatprep.mubr.f32.mxu0 0.0
        %v1010 = vand.u32 %v287, 4294901760
        %v1011 = vsub.f32 %v287, %v1010
        %v1012 = vand.u32 %v1011, 4294901760
        %1013 = vmatmul.mubr.f32.gmra.mrb[0].mxu0 %v1012
        %v1014 = vpop.f32.mrb[0].mxu0
        %v1015 = vadd.f32 %v829, %v1014
        %v1016 = vpop.f32.mrb[0].mxu0
        %1017 = vmatprep.mubr.f32.mxu0 0.0
        %v1018 = vand.u32 %v290, 4294901760
        %v1019 = vsub.f32 %v290, %v1018
        %v1020 = vand.u32 %v1019, 4294901760
        %1021 = vmatmul.mubr.f32.gmra.mrb[0].mxu0 %v1020
        %v1022 = vpop.f32.mrb[0].mxu0
        %v1023 = vadd.f32 %v836, %v1022
        %v1024 = vpop.f32.mrb[0].mxu0
        %1025 = vmatprep.mubr.f32.mxu0 0.0
        %v1026 = vand.u32 %v293, 4294901760
        %v1027 = vsub.f32 %v293, %v1026
        %v1028 = vand.u32 %v1027, 4294901760
        %1029 = vmatmul.mubr.f32.gmra.mrb[0].mxu0 %v1028
        %v1030 = vpop.f32.mrb[0].mxu0
        %v1031 = vadd.f32 %v843, %v1030
        %v1032 = vpop.f32.mrb[0].mxu0
        %1033 = vmatprep.mubr.f32.mxu0 0.0
        %v1034 = vand.u32 %v296, 4294901760
        %v1035 = vsub.f32 %v296, %v1034
        %v1036 = vand.u32 %v1035, 4294901760
        %1037 = vmatmul.mubr.f32.gmra.mrb[0].mxu0 %v1036
        %v1038 = vpop.f32.mrb[0].mxu0
        %v1039 = vadd.f32 %v850, %v1038
        %v1040 = vpop.f32.mrb[0].mxu0
        %1041 = vmatprep.mubr.f32.mxu0 0.0
        %v1042 = vand.u32 %v299, 4294901760
        %v1043 = vsub.f32 %v299, %v1042
        %v1044 = vand.u32 %v1043, 4294901760
        %1045 = vmatmul.mubr.f32.gmra.mrb[0].mxu0 %v1044
        %v1046 = vpop.f32.mrb[0].mxu0
        %v1047 = vadd.f32 %v857, %v1046
        %v1048 = vpop.f32.mrb[0].mxu0
        %1049 = vmatprep.mubr.f32.mxu0 0.0
        %v1050 = vand.u32 %v302, 4294901760
        %v1051 = vsub.f32 %v302, %v1050
        %v1052 = vand.u32 %v1051, 4294901760
        %1053 = vmatmul.mubr.f32.gmra.mrb[0].mxu0 %v1052
        %v1054 = vpop.f32.mrb[0].mxu0
        %v1055 = vadd.f32 %v864, %v1054
        %v1056 = vpop.f32.mrb[0].mxu0
        %1057 = vmatprep.mubr.f32.mxu0 0.0
        %v1058 = vand.u32 %v305, 4294901760
        %v1059 = vsub.f32 %v305, %v1058
        %v1060 = vand.u32 %v1059, 4294901760
        %1061 = vmatmul.mubr.f32.gmra.mrb[0].mxu0 %v1060
        %v1062 = vpop.f32.mrb[0].mxu0
        %v1063 = vadd.f32 %v871, %v1062
        %v1064 = vpop.f32.mrb[0].mxu0
        %1065 = vmatprep.mubr.f32.mxu0 0.0
        %v1066 = vand.u32 %v308, 4294901760
        %v1067 = vsub.f32 %v308, %v1066
        %v1068 = vand.u32 %v1067, 4294901760
        %1069 = vmatmul.mubr.f32.gmra.mrb[0].mxu0 %v1068
        %v1070 = vpop.f32.mrb[0].mxu0
        %v1071 = vadd.f32 %v878, %v1070
        %v1072 = vpop.f32.mrb[0].mxu0
        %1073 = vmatprep.mubr.f32.mxu0 0.0
        %v1074 = vand.u32 %v311, 4294901760
        %v1075 = vsub.f32 %v311, %v1074
        %v1076 = vand.u32 %v1075, 4294901760
        %1077 = vmatmul.mubr.f32.gmra.mrb[0].mxu0 %v1076
        %v1078 = vpop.f32.mrb[0].mxu0
        %v1079 = vadd.f32 %v885, %v1078
        %v1080 = vpop.f32.mrb[0].mxu0
        %1081 = vdwg.mxu0
        %1082 = vmatprep.subr.mxu0 0.0
        %v1083 = vand.u32 %v315, 4294901760
        %v1084 = vsub.f32 %v315, %v1083
        %v1085 = vand.u32 %v1084, 4294901760
        %1086 = vmatpush1.msra.mxu0 %v1085
        %1087 = vmatprep.subr.mxu0 0.0
        %1088 = vmatpush1.msra.mxu0 0.0
        %1089 = vmatprep.subr.mxu0 0.0
        %1090 = vmatpush1.msra.mxu0 0.0
        %1091 = vmatprep.subr.mxu0 0.0
        %1092 = vmatpush1.msra.mxu0 0.0
        %1093 = vmatprep.subr.mxu0 0.0
        %1094 = vmatpush1.msra.mxu0 0.0
        %1095 = vmatprep.subr.mxu0 0.0
        %1096 = vmatpush1.msra.mxu0 0.0
        %1097 = vmatprep.subr.mxu0 0.0
        %1098 = vmatpush1.msra.mxu0 0.0
        %1099 = vmatprep.subr.mxu0 0.0
        %1100 = vmatpush1.msra.mxu0 0.0
        %1101 = vmatprep.subr.mxu0 0.0
        %1102 = vmatpush1.msra.mxu0 0.0
        %1103 = vmatprep.subr.mxu0 0.0
        %1104 = vmatpush1.msra.mxu0 0.0
        %1105 = vmatprep.subr.mxu0 0.0
        %1106 = vmatpush1.msra.mxu0 0.0
        %1107 = vmatprep.subr.mxu0 0.0
        %1108 = vmatpush1.msra.mxu0 0.0
        %1109 = vmatprep.subr.mxu0 0.0
        %1110 = vmatpush1.msra.mxu0 0.0
        %1111 = vmatprep.subr.mxu0 0.0
        %1112 = vmatpush1.msra.mxu0 0.0
        %1113 = vmatprep.subr.mxu0 0.0
        %1114 = vmatpush1.msra.mxu0 0.0
        %1115 = vmatprep.subr.mxu0 0.0
        %1116 = vmatpush1.msra.mxu0 0.0
        %1117 = vmatprep.subr.mxu0 0.0
        %1118 = vmatpush1.msra.mxu0 0.0
        %1119 = vmatprep.subr.mxu0 0.0
        %1120 = vmatpush1.msra.mxu0 0.0
        %1121 = vmatprep.subr.mxu0 0.0
        %1122 = vmatpush1.msra.mxu0 0.0
        %1123 = vmatprep.subr.mxu0 0.0
        %1124 = vmatpush1.msra.mxu0 0.0
        %1125 = vmatprep.subr.mxu0 0.0
        %1126 = vmatpush1.msra.mxu0 0.0
        %1127 = vmatprep.subr.mxu0 0.0
        %1128 = vmatpush1.msra.mxu0 0.0
        %1129 = vmatprep.subr.mxu0 0.0
        %1130 = vmatpush1.msra.mxu0 0.0
        %1131 = vmatprep.subr.mxu0 0.0
        %1132 = vmatpush1.msra.mxu0 0.0
        %1133 = vmatprep.subr.mxu0 0.0
        %1134 = vmatpush1.msra.mxu0 0.0
        %1135 = vmatprep.subr.mxu0 0.0
        %1136 = vmatpush1.msra.mxu0 0.0
        %1137 = vmatprep.subr.mxu0 0.0
        %1138 = vmatpush1.msra.mxu0 0.0
        %1139 = vmatprep.subr.mxu0 0.0
        %1140 = vmatpush1.msra.mxu0 0.0
        %1141 = vmatprep.subr.mxu0 0.0
        %1142 = vmatpush1.msra.mxu0 0.0
        %1143 = vmatprep.subr.mxu0 0.0
        %1144 = vmatpush1.msra.mxu0 0.0
        %1145 = vmatprep.subr.mxu0 0.0
        %1146 = vmatpush1.msra.mxu0 0.0
        %1147 = vmatprep.subr.mxu0 0.0
        %1148 = vmatpush1.msra.mxu0 0.0
        %1149 = vmatprep.mubr.f32.mxu0 0.0
        %v1150 = vand.u32 %v266, 4294901760
        %1151 = vmatmul.mubr.f32.gmra.mrb[0].mxu0 %v1150
        %v1152 = vpop.f32.mrb[0].mxu0
        %v1153 = vadd.f32 %v959, %v1152
        %v1154 = vpop.f32.mrb[0].mxu0
        %1155 = vmatprep.mubr.f32.mxu0 0.0
        %v1156 = vand.u32 %v269, 4294901760
        %1157 = vmatmul.mubr.f32.gmra.mrb[0].mxu0 %v1156
        %v1158 = vpop.f32.mrb[0].mxu0
        %v1159 = vadd.f32 %v967, %v1158
        %v1160 = vpop.f32.mrb[0].mxu0
        %1161 = vmatprep.mubr.f32.mxu0 0.0
        %v1162 = vand.u32 %v272, 4294901760
        %1163 = vmatmul.mubr.f32.gmra.mrb[0].mxu0 %v1162
        %v1164 = vpop.f32.mrb[0].mxu0
        %v1165 = vadd.f32 %v975, %v1164
        %v1166 = vpop.f32.mrb[0].mxu0
        %1167 = vmatprep.mubr.f32.mxu0 0.0
        %v1168 = vand.u32 %v275, 4294901760
        %1169 = vmatmul.mubr.f32.gmra.mrb[0].mxu0 %v1168
        %v1170 = vpop.f32.mrb[0].mxu0
        %v1171 = vadd.f32 %v983, %v1170
        %v1172 = vpop.f32.mrb[0].mxu0
        %1173 = vmatprep.mubr.f32.mxu0 0.0
        %v1174 = vand.u32 %v278, 4294901760
        %1175 = vmatmul.mubr.f32.gmra.mrb[0].mxu0 %v1174
        %v1176 = vpop.f32.mrb[0].mxu0
        %v1177 = vadd.f32 %v991, %v1176
        %v1178 = vpop.f32.mrb[0].mxu0
        %1179 = vmatprep.mubr.f32.mxu0 0.0
        %v1180 = vand.u32 %v281, 4294901760
        %1181 = vmatmul.mubr.f32.gmra.mrb[0].mxu0 %v1180
        %v1182 = vpop.f32.mrb[0].mxu0
        %v1183 = vadd.f32 %v999, %v1182
        %v1184 = vpop.f32.mrb[0].mxu0
        %1185 = vmatprep.mubr.f32.mxu0 0.0
        %v1186 = vand.u32 %v284, 4294901760
        %1187 = vmatmul.mubr.f32.gmra.mrb[0].mxu0 %v1186
        %v1188 = vpop.f32.mrb[0].mxu0
        %v1189 = vadd.f32 %v1007, %v1188
        %v1190 = vpop.f32.mrb[0].mxu0
        %1191 = vmatprep.mubr.f32.mxu0 0.0
        %v1192 = vand.u32 %v287, 4294901760
        %1193 = vmatmul.mubr.f32.gmra.mrb[0].mxu0 %v1192
        %v1194 = vpop.f32.mrb[0].mxu0
        %v1195 = vadd.f32 %v1015, %v1194
        %v1196 = vpop.f32.mrb[0].mxu0
        %1197 = vmatprep.mubr.f32.mxu0 0.0
        %v1198 = vand.u32 %v290, 4294901760
        %1199 = vmatmul.mubr.f32.gmra.mrb[0].mxu0 %v1198
        %v1200 = vpop.f32.mrb[0].mxu0
        %v1201 = vadd.f32 %v1023, %v1200
        %v1202 = vpop.f32.mrb[0].mxu0
        %1203 = vmatprep.mubr.f32.mxu0 0.0
        %v1204 = vand.u32 %v293, 4294901760
        %1205 = vmatmul.mubr.f32.gmra.mrb[0].mxu0 %v1204
        %v1206 = vpop.f32.mrb[0].mxu0
        %v1207 = vadd.f32 %v1031, %v1206
        %v1208 = vpop.f32.mrb[0].mxu0
        %1209 = vmatprep.mubr.f32.mxu0 0.0
        %v1210 = vand.u32 %v296, 4294901760
        %1211 = vmatmul.mubr.f32.gmra.mrb[0].mxu0 %v1210
        %v1212 = vpop.f32.mrb[0].mxu0
        %v1213 = vadd.f32 %v1039, %v1212
        %v1214 = vpop.f32.mrb[0].mxu0
        %1215 = vmatprep.mubr.f32.mxu0 0.0
        %v1216 = vand.u32 %v299, 4294901760
        %1217 = vmatmul.mubr.f32.gmra.mrb[0].mxu0 %v1216
        %v1218 = vpop.f32.mrb[0].mxu0
        %v1219 = vadd.f32 %v1047, %v1218
        %v1220 = vpop.f32.mrb[0].mxu0
        %1221 = vmatprep.mubr.f32.mxu0 0.0
        %v1222 = vand.u32 %v302, 4294901760
        %1223 = vmatmul.mubr.f32.gmra.mrb[0].mxu0 %v1222
        %v1224 = vpop.f32.mrb[0].mxu0
        %v1225 = vadd.f32 %v1055, %v1224
        %v1226 = vpop.f32.mrb[0].mxu0
        %1227 = vmatprep.mubr.f32.mxu0 0.0
        %v1228 = vand.u32 %v305, 4294901760
        %1229 = vmatmul.mubr.f32.gmra.mrb[0].mxu0 %v1228
        %v1230 = vpop.f32.mrb[0].mxu0
        %v1231 = vadd.f32 %v1063, %v1230
        %v1232 = vpop.f32.mrb[0].mxu0
        %1233 = vmatprep.mubr.f32.mxu0 0.0
        %v1234 = vand.u32 %v308, 4294901760
        %1235 = vmatmul.mubr.f32.gmra.mrb[0].mxu0 %v1234
        %v1236 = vpop.f32.mrb[0].mxu0
        %v1237 = vadd.f32 %v1071, %v1236
        %v1238 = vpop.f32.mrb[0].mxu0
        %1239 = vmatprep.mubr.f32.mxu0 0.0
        %v1240 = vand.u32 %v311, 4294901760
        %1241 = vmatmul.mubr.f32.gmra.mrb[0].mxu0 %v1240
        %v1242 = vpop.f32.mrb[0].mxu0
        %v1243 = vadd.f32 %v1079, %v1242
        %v1244 = vpop.f32.mrb[0].mxu0
        %1245 = vdwg.mxu0
        %1246 = vmatprep.subr.mxu0 0.0
        %v1247 = vand.u32 %v315, 4294901760
        %1248 = vmatpush1.msra.mxu0 %v1247
        %1249 = vmatprep.subr.mxu0 0.0
        %1250 = vmatpush1.msra.mxu0 0.0
        %1251 = vmatprep.subr.mxu0 0.0
        %1252 = vmatpush1.msra.mxu0 0.0
        %1253 = vmatprep.subr.mxu0 0.0
        %1254 = vmatpush1.msra.mxu0 0.0
        %1255 = vmatprep.subr.mxu0 0.0
        %1256 = vmatpush1.msra.mxu0 0.0
        %1257 = vmatprep.subr.mxu0 0.0
        %1258 = vmatpush1.msra.mxu0 0.0
        %1259 = vmatprep.subr.mxu0 0.0
        %1260 = vmatpush1.msra.mxu0 0.0
        %1261 = vmatprep.subr.mxu0 0.0
        %1262 = vmatpush1.msra.mxu0 0.0
        %1263 = vmatprep.subr.mxu0 0.0
        %1264 = vmatpush1.msra.mxu0 0.0
        %1265 = vmatprep.subr.mxu0 0.0
        %1266 = vmatpush1.msra.mxu0 0.0
        %1267 = vmatprep.subr.mxu0 0.0
        %1268 = vmatpush1.msra.mxu0 0.0
        %1269 = vmatprep.subr.mxu0 0.0
        %1270 = vmatpush1.msra.mxu0 0.0
        %1271 = vmatprep.subr.mxu0 0.0
        %1272 = vmatpush1.msra.mxu0 0.0
        %1273 = vmatprep.subr.mxu0 0.0
        %1274 = vmatpush1.msra.mxu0 0.0
        %1275 = vmatprep.subr.mxu0 0.0
        %1276 = vmatpush1.msra.mxu0 0.0
        %1277 = vmatprep.subr.mxu0 0.0
        %1278 = vmatpush1.msra.mxu0 0.0
        %1279 = vmatprep.subr.mxu0 0.0
        %1280 = vmatpush1.msra.mxu0 0.0
        %1281 = vmatprep.subr.mxu0 0.0
        %1282 = vmatpush1.msra.mxu0 0.0
        %1283 = vmatprep.subr.mxu0 0.0
        %1284 = vmatpush1.msra.mxu0 0.0
        %1285 = vmatprep.subr.mxu0 0.0
        %1286 = vmatpush1.msra.mxu0 0.0
        %1287 = vmatprep.subr.mxu0 0.0
        %1288 = vmatpush1.msra.mxu0 0.0
        %1289 = vmatprep.subr.mxu0 0.0
        %1290 = vmatpush1.msra.mxu0 0.0
        %1291 = vmatprep.subr.mxu0 0.0
        %1292 = vmatpush1.msra.mxu0 0.0
        %1293 = vmatprep.subr.mxu0 0.0
        %1294 = vmatpush1.msra.mxu0 0.0
        %1295 = vmatprep.subr.mxu0 0.0
        %1296 = vmatpush1.msra.mxu0 0.0
        %1297 = vmatprep.subr.mxu0 0.0
        %1298 = vmatpush1.msra.mxu0 0.0
        %1299 = vmatprep.subr.mxu0 0.0
        %1300 = vmatpush1.msra.mxu0 0.0
        %1301 = vmatprep.subr.mxu0 0.0
        %1302 = vmatpush1.msra.mxu0 0.0
        %1303 = vmatprep.subr.mxu0 0.0
        %1304 = vmatpush1.msra.mxu0 0.0
        %1305 = vmatprep.subr.mxu0 0.0
        %1306 = vmatpush1.msra.mxu0 0.0
        %1307 = vmatprep.subr.mxu0 0.0
        %1308 = vmatpush1.msra.mxu0 0.0
        %1309 = vmatprep.subr.mxu0 0.0
        %1310 = vmatpush1.msra.mxu0 0.0
        %1311 = vmatprep.mubr.f32.mxu0 0.0
        %v1312 = vand.u32 %v266, 4294901760
        %1313 = vmatmul.mubr.f32.gmra.mrb[0].mxu0 %v1312
        %v1314 = vpop.f32.mrb[0].mxu0
        %v1315 = vadd.f32 %v1153, %v1314
        %v1316 = vpop.f32.mrb[0].mxu0
        %1317 = vmatprep.mubr.f32.mxu0 0.0
        %v1318 = vand.u32 %v269, 4294901760
        %1319 = vmatmul.mubr.f32.gmra.mrb[0].mxu0 %v1318
        %v1320 = vpop.f32.mrb[0].mxu0
        %v1321 = vadd.f32 %v1159, %v1320
        %v1322 = vpop.f32.mrb[0].mxu0
        %1323 = vmatprep.mubr.f32.mxu0 0.0
        %v1324 = vand.u32 %v272, 4294901760
        %1325 = vmatmul.mubr.f32.gmra.mrb[0].mxu0 %v1324
        %v1326 = vpop.f32.mrb[0].mxu0
        %v1327 = vadd.f32 %v1165, %v1326
        %v1328 = vpop.f32.mrb[0].mxu0
        %1329 = vmatprep.mubr.f32.mxu0 0.0
        %v1330 = vand.u32 %v275, 4294901760
        %1331 = vmatmul.mubr.f32.gmra.mrb[0].mxu0 %v1330
        %v1332 = vpop.f32.mrb[0].mxu0
        %v1333 = vadd.f32 %v1171, %v1332
        %v1334 = vpop.f32.mrb[0].mxu0
        %1335 = vmatprep.mubr.f32.mxu0 0.0
        %v1336 = vand.u32 %v278, 4294901760
        %1337 = vmatmul.mubr.f32.gmra.mrb[0].mxu0 %v1336
        %v1338 = vpop.f32.mrb[0].mxu0
        %v1339 = vadd.f32 %v1177, %v1338
        %v1340 = vpop.f32.mrb[0].mxu0
        %1341 = vmatprep.mubr.f32.mxu0 0.0
        %v1342 = vand.u32 %v281, 4294901760
        %1343 = vmatmul.mubr.f32.gmra.mrb[0].mxu0 %v1342
        %v1344 = vpop.f32.mrb[0].mxu0
        %v1345 = vadd.f32 %v1183, %v1344
        %v1346 = vpop.f32.mrb[0].mxu0
        %1347 = vmatprep.mubr.f32.mxu0 0.0
        %v1348 = vand.u32 %v284, 4294901760
        %1349 = vmatmul.mubr.f32.gmra.mrb[0].mxu0 %v1348
        %v1350 = vpop.f32.mrb[0].mxu0
        %v1351 = vadd.f32 %v1189, %v1350
        %v1352 = vpop.f32.mrb[0].mxu0
        %1353 = vmatprep.mubr.f32.mxu0 0.0
        %v1354 = vand.u32 %v287, 4294901760
        %1355 = vmatmul.mubr.f32.gmra.mrb[0].mxu0 %v1354
        %v1356 = vpop.f32.mrb[0].mxu0
        %v1357 = vadd.f32 %v1195, %v1356
        %v1358 = vpop.f32.mrb[0].mxu0
        %1359 = vmatprep.mubr.f32.mxu0 0.0
        %v1360 = vand.u32 %v290, 4294901760
        %1361 = vmatmul.mubr.f32.gmra.mrb[0].mxu0 %v1360
        %v1362 = vpop.f32.mrb[0].mxu0
        %v1363 = vadd.f32 %v1201, %v1362
        %v1364 = vpop.f32.mrb[0].mxu0
        %1365 = vmatprep.mubr.f32.mxu0 0.0
        %v1366 = vand.u32 %v293, 4294901760
        %1367 = vmatmul.mubr.f32.gmra.mrb[0].mxu0 %v1366
        %v1368 = vpop.f32.mrb[0].mxu0
        %v1369 = vadd.f32 %v1207, %v1368
        %v1370 = vpop.f32.mrb[0].mxu0
        %1371 = vmatprep.mubr.f32.mxu0 0.0
        %v1372 = vand.u32 %v296, 4294901760
        %1373 = vmatmul.mubr.f32.gmra.mrb[0].mxu0 %v1372
        %v1374 = vpop.f32.mrb[0].mxu0
        %v1375 = vadd.f32 %v1213, %v1374
        %v1376 = vpop.f32.mrb[0].mxu0
        %1377 = vmatprep.mubr.f32.mxu0 0.0
        %v1378 = vand.u32 %v299, 4294901760
        %1379 = vmatmul.mubr.f32.gmra.mrb[0].mxu0 %v1378
        %v1380 = vpop.f32.mrb[0].mxu0
        %v1381 = vadd.f32 %v1219, %v1380
        %v1382 = vpop.f32.mrb[0].mxu0
        %1383 = vmatprep.mubr.f32.mxu0 0.0
        %v1384 = vand.u32 %v302, 4294901760
        %1385 = vmatmul.mubr.f32.gmra.mrb[0].mxu0 %v1384
        %v1386 = vpop.f32.mrb[0].mxu0
        %v1387 = vadd.f32 %v1225, %v1386
        %v1388 = vpop.f32.mrb[0].mxu0
        %1389 = vmatprep.mubr.f32.mxu0 0.0
        %v1390 = vand.u32 %v305, 4294901760
        %1391 = vmatmul.mubr.f32.gmra.mrb[0].mxu0 %v1390
        %v1392 = vpop.f32.mrb[0].mxu0
        %v1393 = vadd.f32 %v1231, %v1392
        %v1394 = vpop.f32.mrb[0].mxu0
        %1395 = vmatprep.mubr.f32.mxu0 0.0
        %v1396 = vand.u32 %v308, 4294901760
        %1397 = vmatmul.mubr.f32.gmra.mrb[0].mxu0 %v1396
        %v1398 = vpop.f32.mrb[0].mxu0
        %v1399 = vadd.f32 %v1237, %v1398
        %v1400 = vpop.f32.mrb[0].mxu0
        %1401 = vmatprep.mubr.f32.mxu0 0.0
        %v1402 = vand.u32 %v311, 4294901760
        %1403 = vmatmul.mubr.f32.gmra.mrb[0].mxu0 %v1402
        %v1404 = vpop.f32.mrb[0].mxu0
        %v1405 = vadd.f32 %v1243, %v1404
        %v1406 = vpop.f32.mrb[0].mxu0
        %1407 = vdwg.mxu0
        %v1408 = vmin.f32 %v1315, %v1339
        %v1409 = vmin.f32 %v1321, %v1345
        %v1410 = vmin.f32 %v1327, %v1351
        %v1411 = vmin.f32 %v1333, %v1357
        %v1412 = vmin.f32 %v1408, %v1363
        %v1413 = vmin.f32 %v1409, %v1369
        %v1414 = vmin.f32 %v1410, %v1375
        %v1415 = vmin.f32 %v1411, %v1381
        %v1416 = vmin.f32 %v1412, %v1387
        %v1417 = vmin.f32 %v1413, %v1393
        %v1418 = vmin.f32 %v1414, %v1399
        %v1419 = vmin.f32 %v1415, %v1405
        %v1420 = vmin.f32 %v1416, %v1417
        %v1421 = vmin.f32 %v1418, %v1419
        %v1422 = vmin.f32 %v1420, %v1421
        %v1423 = vrot.slane %v1422, 4
        %v1424 = vmin.f32 %v1422, %v1423
        %v1425 = vrot.slane %v1424, 2
        %v1426 = vmin.f32 %v1424, %v1425
        %v1427 = vrot.slane %v1426, 1
        %v1428 = vmin.f32 %v1426, %v1427
        %1429 = vst [vmem:[%s229] sm:$0x1] %v1428
        %p1430 = scmp.eq.s32.totalorder %s28, 0
        // Predicated region
        $region29: #{tpu_custom_call.1} parent=27 // pred_check
          %p1431 = pneg %p1430
        $region30: #{tpu_custom_call.1} parent=27 // pred_check_branch
          %1433 = sbr.rel (%p1431) target = $region32
        $region31: #{tpu_custom_call.1} parent=27 // pred_region
          %1434 = vst [vmem:[#allocation2] sm:$0xff] %v1315
          %1435 = vst [vmem:[#allocation2 + $0x8] sm:$0xff] %v1321
          %1436 = vst [vmem:[#allocation2 + $0x10] sm:$0xff] %v1327
          %1437 = vst [vmem:[#allocation2 + $0x18] sm:$0xff] %v1333
          %1438 = vst [vmem:[#allocation2 + $0x20] sm:$0xff] %v1339
          %1439 = vst [vmem:[#allocation2 + $0x28] sm:$0xff] %v1345
          %1440 = vst [vmem:[#allocation2 + $0x30] sm:$0xff] %v1351
          %1441 = vst [vmem:[#allocation2 + $0x38] sm:$0xff] %v1357
          %1442 = vst [vmem:[#allocation2 + $0x40] sm:$0xff] %v1363
          %1443 = vst [vmem:[#allocation2 + $0x48] sm:$0xff] %v1369
          %1444 = vst [vmem:[#allocation2 + $0x50] sm:$0xff] %v1375
          %1445 = vst [vmem:[#allocation2 + $0x58] sm:$0xff] %v1381
          %1446 = vst [vmem:[#allocation2 + $0x60] sm:$0xff] %v1387
          %1447 = vst [vmem:[#allocation2 + $0x68] sm:$0xff] %v1393
          %1448 = vst [vmem:[#allocation2 + $0x70] sm:$0xff] %v1399
          %1449 = vst [vmem:[#allocation2 + $0x78] sm:$0xff] %v1405
        $region32: #{tpu_custom_call.1} parent=27 // pred_fallthru
          _
        %p1450 = scmp.gt.s32.totalorder %s28, 0
        // Predicated region
        $region33: #{tpu_custom_call.1} parent=27 // pred_check
          %p1451 = pneg %p1450
        $region34: #{tpu_custom_call.1} parent=27 // pred_check_branch
          %1453 = sbr.rel (%p1451) target = $region36
        $region35: #{tpu_custom_call.1} parent=27 // pred_region
          %v1454 = vld [vmem:[#allocation2] sm:$0xff]
          %v1455 = vld [vmem:[#allocation2 + $0x8] sm:$0xff]
          %v1456 = vld [vmem:[#allocation2 + $0x10] sm:$0xff]
          %v1457 = vld [vmem:[#allocation2 + $0x18] sm:$0xff]
          %v1458 = vld [vmem:[#allocation2 + $0x20] sm:$0xff]
          %v1459 = vld [vmem:[#allocation2 + $0x28] sm:$0xff]
          %v1460 = vld [vmem:[#allocation2 + $0x30] sm:$0xff]
          %v1461 = vld [vmem:[#allocation2 + $0x38] sm:$0xff]
          %v1462 = vld [vmem:[#allocation2 + $0x40] sm:$0xff]
          %v1463 = vld [vmem:[#allocation2 + $0x48] sm:$0xff]
          %v1464 = vld [vmem:[#allocation2 + $0x50] sm:$0xff]
          %v1465 = vld [vmem:[#allocation2 + $0x58] sm:$0xff]
          %v1466 = vld [vmem:[#allocation2 + $0x60] sm:$0xff]
          %v1467 = vld [vmem:[#allocation2 + $0x68] sm:$0xff]
          %v1468 = vld [vmem:[#allocation2 + $0x70] sm:$0xff]
          %v1469 = vld [vmem:[#allocation2 + $0x78] sm:$0xff]
          %v1470 = vmin.f32 %v1454, %v1315
          %v1471 = vmin.f32 %v1455, %v1321
          %v1472 = vmin.f32 %v1456, %v1327
          %v1473 = vmin.f32 %v1457, %v1333
          %v1474 = vmin.f32 %v1458, %v1339
          %v1475 = vmin.f32 %v1459, %v1345
          %v1476 = vmin.f32 %v1460, %v1351
          %v1477 = vmin.f32 %v1461, %v1357
          %v1478 = vmin.f32 %v1462, %v1363
          %v1479 = vmin.f32 %v1463, %v1369
          %v1480 = vmin.f32 %v1464, %v1375
          %v1481 = vmin.f32 %v1465, %v1381
          %v1482 = vmin.f32 %v1466, %v1387
          %v1483 = vmin.f32 %v1467, %v1393
          %v1484 = vmin.f32 %v1468, %v1399
          %v1485 = vmin.f32 %v1469, %v1405
          %1486 = vst [vmem:[#allocation2] sm:$0xff] %v1470
          %1487 = vst [vmem:[#allocation2 + $0x8] sm:$0xff] %v1471
          %1488 = vst [vmem:[#allocation2 + $0x10] sm:$0xff] %v1472
          %1489 = vst [vmem:[#allocation2 + $0x18] sm:$0xff] %v1473
          %1490 = vst [vmem:[#allocation2 + $0x20] sm:$0xff] %v1474
          %1491 = vst [vmem:[#allocation2 + $0x28] sm:$0xff] %v1475
          %1492 = vst [vmem:[#allocation2 + $0x30] sm:$0xff] %v1476
          %1493 = vst [vmem:[#allocation2 + $0x38] sm:$0xff] %v1477
          %1494 = vst [vmem:[#allocation2 + $0x40] sm:$0xff] %v1478
          %1495 = vst [vmem:[#allocation2 + $0x48] sm:$0xff] %v1479
          %1496 = vst [vmem:[#allocation2 + $0x50] sm:$0xff] %v1480
          %1497 = vst [vmem:[#allocation2 + $0x58] sm:$0xff] %v1481
          %1498 = vst [vmem:[#allocation2 + $0x60] sm:$0xff] %v1482
          %1499 = vst [vmem:[#allocation2 + $0x68] sm:$0xff] %v1483
          %1500 = vst [vmem:[#allocation2 + $0x70] sm:$0xff] %v1484
          %1501 = vst [vmem:[#allocation2 + $0x78] sm:$0xff] %v1485
        $region36: #{tpu_custom_call.1} parent=27 // pred_fallthru
          _
        // Predicated region
        $region37: #{tpu_custom_call.1} parent=27 // pred_check
          %p1502 = pneg %p1430
        $region38: #{tpu_custom_call.1} parent=27 // pred_check_branch
          %1504 = sbr.rel (%p1502) target = $region40
        $region39: #{tpu_custom_call.1} parent=27 // pred_region
          %v1505 = vld [vmem:[#allocation2] sm:$0xff]
          %v1506 = vld [vmem:[#allocation2 + $0x8] sm:$0xff]
          %v1507 = vld [vmem:[#allocation2 + $0x10] sm:$0xff]
          %v1508 = vld [vmem:[#allocation2 + $0x18] sm:$0xff]
          %v1509 = vld [vmem:[#allocation2 + $0x20] sm:$0xff]
          %v1510 = vld [vmem:[#allocation2 + $0x28] sm:$0xff]
          %v1511 = vld [vmem:[#allocation2 + $0x30] sm:$0xff]
          %v1512 = vld [vmem:[#allocation2 + $0x38] sm:$0xff]
          %v1513 = vld [vmem:[#allocation2 + $0x40] sm:$0xff]
          %v1514 = vld [vmem:[#allocation2 + $0x48] sm:$0xff]
          %v1515 = vld [vmem:[#allocation2 + $0x50] sm:$0xff]
          %v1516 = vld [vmem:[#allocation2 + $0x58] sm:$0xff]
          %v1517 = vld [vmem:[#allocation2 + $0x60] sm:$0xff]
          %v1518 = vld [vmem:[#allocation2 + $0x68] sm:$0xff]
          %v1519 = vld [vmem:[#allocation2 + $0x70] sm:$0xff]
          %v1520 = vld [vmem:[#allocation2 + $0x78] sm:$0xff]
          %1521 = vmin.xlane.f32.xlu0 %v1505
          %v1522 = vpop.xlane.xlu0 %1521
          %1523 = vmin.xlane.f32.xlu0 %v1506
          %v1524 = vpop.xlane.xlu0 %1523
          %1525 = vmin.xlane.f32.xlu0 %v1507
          %v1526 = vpop.xlane.xlu0 %1525
          %1527 = vmin.xlane.f32.xlu0 %v1508
          %v1528 = vpop.xlane.xlu0 %1527
          %1529 = vmin.xlane.f32.xlu0 %v1509
          %v1530 = vpop.xlane.xlu0 %1529
          %1531 = vmin.xlane.f32.xlu0 %v1510
          %v1532 = vpop.xlane.xlu0 %1531
          %1533 = vmin.xlane.f32.xlu0 %v1511
          %v1534 = vpop.xlane.xlu0 %1533
          %1535 = vmin.xlane.f32.xlu0 %v1512
          %v1536 = vpop.xlane.xlu0 %1535
          %1537 = vmin.xlane.f32.xlu0 %v1513
          %v1538 = vpop.xlane.xlu0 %1537
          %1539 = vmin.xlane.f32.xlu0 %v1514
          %v1540 = vpop.xlane.xlu0 %1539
          %1541 = vmin.xlane.f32.xlu0 %v1515
          %v1542 = vpop.xlane.xlu0 %1541
          %1543 = vmin.xlane.f32.xlu0 %v1516
          %v1544 = vpop.xlane.xlu0 %1543
          %1545 = vmin.xlane.f32.xlu0 %v1517
          %v1546 = vpop.xlane.xlu0 %1545
          %1547 = vmin.xlane.f32.xlu0 %v1518
          %v1548 = vpop.xlane.xlu0 %1547
          %1549 = vmin.xlane.f32.xlu0 %v1519
          %v1550 = vpop.xlane.xlu0 %1549
          %1551 = vmin.xlane.f32.xlu0 %v1520
          %v1552 = vpop.xlane.xlu0 %1551
          %v1569 = vlaneseq
          %v1570 = vand.u32 %v1569, 127
          %v1571 = vlaneseq
          %v1572 = vshrl.u32 %v1571, 7
          %v1573 = vsub.s32 %v1570, %v1572
          %v1574 = vrot.slane %v1522, %v1573
          %v1575 = vadd.s32 %v1570, 4294967288
          %v1576 = vlaneseq
          %v1577 = vshrl.u32 %v1576, 7
          %v1578 = vsub.s32 %v1575, %v1577
          %v1579 = vrot.slane %v1524, %v1578
          %vm1580 = vcmask 130112
          %v1581 = vsel %vm1580, %v1579, %v1574
          %v1582 = vadd.s32 %v1570, 4294967280
          %v1583 = vlaneseq
          %v1584 = vshrl.u32 %v1583, 7
          %v1585 = vsub.s32 %v1582, %v1584
          %v1586 = vrot.slane %v1526, %v1585
          %vm1587 = vcmask 195712
          %v1588 = vsel %vm1587, %v1586, %v1581
          %v1589 = vadd.s32 %v1570, 4294967272
          %v1590 = vlaneseq
          %v1591 = vshrl.u32 %v1590, 7
          %v1592 = vsub.s32 %v1589, %v1591
          %v1593 = vrot.slane %v1528, %v1592
          %vm1594 = vcmask 261312
          %v1595 = vsel %vm1594, %v1593, %v1588
          %v1596 = vadd.s32 %v1570, 4294967264
          %v1597 = vlaneseq
          %v1598 = vshrl.u32 %v1597, 7
          %v1599 = vsub.s32 %v1596, %v1598
          %v1600 = vrot.slane %v1530, %v1599
          %vm1601 = vcmask 326912
          %v1602 = vsel %vm1601, %v1600, %v1595
          %v1603 = vadd.s32 %v1570, 4294967256
          %v1604 = vlaneseq
          %v1605 = vshrl.u32 %v1604, 7
          %v1606 = vsub.s32 %v1603, %v1605
          %v1607 = vrot.slane %v1532, %v1606
          %vm1608 = vcmask 392512
          %v1609 = vsel %vm1608, %v1607, %v1602
          %v1610 = vadd.s32 %v1570, 4294967248
          %v1611 = vlaneseq
          %v1612 = vshrl.u32 %v1611, 7
          %v1613 = vsub.s32 %v1610, %v1612
          %v1614 = vrot.slane %v1534, %v1613
          %vm1615 = vcmask 458112
          %v1616 = vsel %vm1615, %v1614, %v1609
          %v1617 = vadd.s32 %v1570, 4294967240
          %v1618 = vlaneseq
          %v1619 = vshrl.u32 %v1618, 7
          %v1620 = vsub.s32 %v1617, %v1619
          %v1621 = vrot.slane %v1536, %v1620
          %vm1622 = vcmask 523712
          %v1623 = vsel %vm1622, %v1621, %v1616
          %v1624 = vadd.s32 %v1570, 4294967232
          %v1625 = vlaneseq
          %v1626 = vshrl.u32 %v1625, 7
          %v1627 = vsub.s32 %v1624, %v1626
          %v1628 = vrot.slane %v1538, %v1627
          %vm1629 = vcmask 589312
          %v1630 = vsel %vm1629, %v1628, %v1623
          %v1631 = vadd.s32 %v1570, 4294967224
          %v1632 = vlaneseq
          %v1633 = vshrl.u32 %v1632, 7
          %v1634 = vsub.s32 %v1631, %v1633
          %v1635 = vrot.slane %v1540, %v1634
          %vm1636 = vcmask 654912
          %v1637 = vsel %vm1636, %v1635, %v1630
          %v1638 = vadd.s32 %v1570, 4294967216
          %v1639 = vlaneseq
          %v1640 = vshrl.u32 %v1639, 7
          %v1641 = vsub.s32 %v1638, %v1640
          %v1642 = vrot.slane %v1542, %v1641
          %vm1643 = vcmask 720512
          %v1644 = vsel %vm1643, %v1642, %v1637
          %v1645 = vadd.s32 %v1570, 4294967208
          %v1646 = vlaneseq
          %v1647 = vshrl.u32 %v1646, 7
          %v1648 = vsub.s32 %v1645, %v1647
          %v1649 = vrot.slane %v1544, %v1648
          %vm1650 = vcmask 786112
          %v1651 = vsel %vm1650, %v1649, %v1644
          %v1652 = vadd.s32 %v1570, 4294967200
          %v1653 = vlaneseq
          %v1654 = vshrl.u32 %v1653, 7
          %v1655 = vsub.s32 %v1652, %v1654
          %v1656 = vrot.slane %v1546, %v1655
          %vm1657 = vcmask 851712
          %v1658 = vsel %vm1657, %v1656, %v1651
          %v1659 = vadd.s32 %v1570, 4294967192
          %v1660 = vlaneseq
          %v1661 = vshrl.u32 %v1660, 7
          %v1662 = vsub.s32 %v1659, %v1661
          %v1663 = vrot.slane %v1548, %v1662
          %vm1664 = vcmask 917312
          %v1665 = vsel %vm1664, %v1663, %v1658
          %v1666 = vadd.s32 %v1570, 4294967184
          %v1667 = vlaneseq
          %v1668 = vshrl.u32 %v1667, 7
          %v1669 = vsub.s32 %v1666, %v1668
          %v1670 = vrot.slane %v1550, %v1669
          %vm1671 = vcmask 982912
          %v1672 = vsel %vm1671, %v1670, %v1665
          %v1673 = vadd.s32 %v1570, 4294967176
          %v1674 = vlaneseq
          %v1675 = vshrl.u32 %v1674, 7
          %v1676 = vsub.s32 %v1673, %v1675
          %v1677 = vrot.slane %v1552, %v1676
          %vm1678 = vcmask 1048512
          %v1679 = vsel %vm1678, %v1677, %v1672
          %1681 = vst [vmem:[%s223] sm:$0x1] %v1679
        $region40: #{tpu_custom_call.1} parent=27 // pred_fallthru
          _
        %s1682 = sand.u32 %s106, 1
        %s1683 = scalar_lea.sflag [#allocation4], %s1682
        %s1684 = sand.u32 %s106, 1
        %s1685 = scalar_lea.vmem [#allocation3], %s1684
        %s1686 = sand.u32 %s136, 1
        %s1687 = scalar_lea.sflag [#allocation6], %s1686
        %s1688 = sand.u32 %s136, 1
        %s1689 = scalar_lea.vmem [#allocation5], %s1688
        // Predicated region
        $region41: #{tpu_custom_call.1} parent=27 // pred_check
          %p1690 = pneg %p116
        $region42: #{tpu_custom_call.1} parent=27 // pred_check_branch
          %1692 = sbr.rel (%p1690) target = $region44
        $region43: #{tpu_custom_call.1} parent=27 // pred_region
          %s1694 = ssub.s32 16, 16
          %1695 = vsyncadd %s1683, %s1694
          %s1696 = sadd.s32 %s27, %s26
          %s1697 = smul.addr %s1696, 16
          %s1698 = scalar_lea.hbm %s2, %s1697
          %s1700 = sshll.u32 %s1685, 4
          %s1701 = int_to_ptr.vmem [resolvable:$true] %s1700
          %1703 = dma.vmem_to_hbm [thread:$0]  %s1701, 16, %s1698, %s1683
        $region44: #{tpu_custom_call.1} parent=27 // pred_fallthru
          _
        // Predicated region
        $region45: #{tpu_custom_call.1} parent=27 // pred_check
          %p1704 = pneg %p146
        $region46: #{tpu_custom_call.1} parent=27 // pred_check_branch
          %1706 = sbr.rel (%p1704) target = $region48
        $region47: #{tpu_custom_call.1} parent=27 // pred_region
          %s1708 = ssub.s32 16, 16
          %1709 = vsyncadd %s1687, %s1708
          %s1710 = sadd.s32 %s28, %s27
          %s1711 = sadd.s32 %s1710, %s26
          %s1712 = smul.addr %s1711, 16
          %s1713 = scalar_lea.hbm %s3, %s1712
          %s1715 = sshll.u32 %s1689, 4
          %s1716 = int_to_ptr.vmem [resolvable:$true] %s1715
          %1718 = dma.vmem_to_hbm [thread:$0]  %s1716, 16, %s1713, %s1687
        $region48: #{tpu_custom_call.1} parent=27 // pred_fallthru
          _
      $region28: #{tpu_custom_call.1} parent=5 // pred_fallthru
        _
      %p1719 = scmp.le.s32.totalorder 2, %s16
      // Predicated region
      $region49: #{tpu_custom_call.1} parent=5 // pred_check
        %p1720 = pneg %p1719
      $region50: #{tpu_custom_call.1} parent=5 // pred_check_branch
        %1722 = sbr.rel (%p1720) target = $region52
      $region51: #{tpu_custom_call.1} parent=5 // pred_region
        %s1723 = ssub.s32 %s16, 2
        // Predicated region
        $region53: #{tpu_custom_call.1} parent=51 // pred_check
          %p1724 = pneg %p122
        $region54: #{tpu_custom_call.1} parent=51 // pred_check_branch
          %1726 = sbr.rel (%p1724) target = $region56
        $region55: #{tpu_custom_call.1} parent=51 // pred_region
          %s1727 = sand.u32 %s107, 1
          %s1728 = scalar_lea.sflag [#allocation4], %s1727
          %s1729 = sand.u32 %s107, 1
          %s1730 = scalar_lea.vmem [#allocation3], %s1729
          %1731 = dma.done %s1728, 16
        $region56: #{tpu_custom_call.1} parent=51 // pred_fallthru
          _
        // Predicated region
        $region57: #{tpu_custom_call.1} parent=51 // pred_check
          %p1732 = pneg %p152
        $region58: #{tpu_custom_call.1} parent=51 // pred_check_branch
          %1734 = sbr.rel (%p1732) target = $region60
        $region59: #{tpu_custom_call.1} parent=51 // pred_region
          %s1735 = sand.u32 %s137, 1
          %s1736 = scalar_lea.sflag [#allocation6], %s1735
          %s1737 = sand.u32 %s137, 1
          %s1738 = scalar_lea.vmem [#allocation5], %s1737
          %1739 = dma.done %s1736, 16
        $region60: #{tpu_custom_call.1} parent=51 // pred_fallthru
          _
      $region52: #{tpu_custom_call.1} parent=5 // pred_fallthru
        _
    $region6: #{tpu_custom_call.1} parent=1 // loop_footer
      %s20 = sadd.s32 1, %s16
    $region7: #{tpu_custom_call.1} parent=1 // loop_footer_branch
      %15 = sbr.rel target = $region3
    $region8: #{tpu_custom_call.1} parent=1 // loop_exit
      _
    %1740 = vsyncpa [#allocation4], 1
    %s1741 = scalar_lea.sflag [#allocation4], 1
    %1742 = vsyncpa %s1741, 1
    %1743 = vsyncpa [#allocation6], 1
    %s1744 = scalar_lea.sflag [#allocation6], 1
    %1745 = vsyncpa %s1744, 1

</llo_original>
